<compile_context>
chip_gen: v6e
topology: v6e:2x2x1
jax: 0.10.0
libtpu: 0.0.40
codegen_flags: <defaults>
</compile_context>

<pallas_src>
import numpy as np
import jax
import jax.numpy as jnp
from jax.experimental import pallas as pl
from jax.experimental.pallas import tpu as pltpu


# --------------------------------------------------------------------------
# Gabor filter construction (re-implementation of cv2.getGaborKernel, CV_32F)
# --------------------------------------------------------------------------
def _get_gabor_kernel(ksize, sigma, theta, lambd, gamma, psi):
    sigma_x = sigma
    sigma_y = sigma / gamma
    half = ksize // 2
    c, s = np.cos(theta), np.sin(theta)
    ys, xs = np.meshgrid(
        np.arange(-half, half + 1, dtype=np.float64),
        np.arange(-half, half + 1, dtype=np.float64),
        indexing="ij",
    )
    xr = xs * c + ys * s
    yr = -xs * s + ys * c
    v = np.exp(-0.5 * (xr**2 / sigma_x**2 + yr**2 / sigma_y**2)) * np.cos(
        2.0 * np.pi / lambd * xr + psi
    )
    # OpenCV writes kernel[ymax - y, xmax - x] -> flip both axes vs. meshgrid order
    return np.flip(np.flip(v, 0), 1).astype(np.float32)


def create_gabor_filters(in_channels, out_channels, kernel_size):
    """Replicates GaborLayer.create_gabor_filters -> (out_ch, in_ch, k, k) f32.

    Note: as in the PyTorch module, the .view() is only valid for in_channels == 1.
    """
    num_orientations = out_channels // in_channels
    kernels = []
    for _i in range(in_channels):
        for j in range(num_orientations):
            theta = j * np.pi / num_orientations
            kernels.append(
                _get_gabor_kernel(kernel_size, sigma=2.0, theta=theta,
                                  lambd=10.0, gamma=0.5, psi=0.0)
            )
    filt = np.stack(kernels, axis=0).astype(np.float32)
    filt = filt.reshape(out_channels, in_channels, kernel_size, kernel_size)
    return jnp.asarray(filt)


# --------------------------------------------------------------------------
# Row-tile selection
# --------------------------------------------------------------------------
def _pick_row_tile(H, W, max_tile_elems=4096):
    """Row tile TH that divides H and is a multiple of 8 (sublane alignment of
    the output block), keeping the per-tile accumulators ~vreg sized."""
    divs = [th for th in range(8, H + 1, 8) if H % th == 0]
    if not divs:
        return H                       # e.g. odd H: one full-height tile
    fitting = [th for th in divs if th * W <= max_tile_elems]
    return max(fitting) if fitting else min(divs)


# --------------------------------------------------------------------------
# Pallas kernel: same-padded 2D conv (cross-correlation), per-tap accumulation
# --------------------------------------------------------------------------
def gabor_conv2d(x_nchw, filters_oihw, *, row_tile=None):
    """NCHW in -> NCHW out, fixed-filter conv with padding = K // 2."""
    N, Cin, H, W = x_nchw.shape
    Cout, Cin_w, K, K2 = filters_oihw.shape
    assert Cin == 1 and Cin_w == 1 and K == K2, (
        "GaborLayer's filter construction is only valid for in_channels == 1")
    pad = K // 2
    Hp, Wp = H + 2 * pad, W + 2 * pad

    TH = _pick_row_tile(H, W) if row_tile is None else row_tile
    assert H % TH == 0 and (TH % 8 == 0 or TH == H), "invalid row tile"
    R = H // TH

    # Glue: Cin == 1 makes the NCHW -> (N, H, W) layout change a free reshape.
    # Border padding is folded into one small jnp.pad pass so every in-kernel
    # tap window is a plain in-bounds slice.
    x_img = x_nchw.reshape(N, H, W)
    x_pad = jnp.pad(x_img, ((0, 0), (pad, pad), (pad, pad)))
    # Flat (co, kh, kw) tap vector for SMEM.
    w_taps = filters_oihw.reshape(-1)

    def kernel(x_ref, w_ref, o_ref):
        # x_ref: (1, Hp, Wp) padded image of batch n (VMEM-resident across row tiles)
        # w_ref: (Cout*K*K,) filter taps in SMEM
        # o_ref: (1, Cout, TH, W) NCHW-native output row tile
        r = pl.program_id(1)
        row0 = pl.multiple_of(r * TH, TH)
        accs = [jnp.zeros((TH, W), jnp.float32) for _ in range(Cout)]
        for kh in range(K):
            rows = x_ref[0, pl.ds(row0 + kh, TH), :]           # (TH, Wp)
            for kw in range(K):
                window = rows[:, kw:kw + W]                    # (TH, W)
                base = kh * K + kw
                for co in range(Cout):
                    accs[co] = accs[co] + w_ref[co * K * K + base] * window
        for co in range(Cout):
            o_ref[0, co, :, :] = accs[co].astype(o_ref.dtype)

    out = pl.pallas_call(
        kernel,
        out_shape=jax.ShapeDtypeStruct((N, Cout, H, W), x_nchw.dtype),
        grid_spec=pltpu.PrefetchScalarGridSpec(
            num_scalar_prefetch=0,
            grid=(N, R),
            in_specs=[
                # Full padded image per batch; block index depends only on n,
                # so it stays resident while the row tiles of that batch run.
                pl.BlockSpec((1, Hp, Wp), lambda n, r: (n, 0, 0)),
                # Tiny tap table -> SMEM, read as scalars and VPU-broadcast.
                pl.BlockSpec(memory_space=pltpu.MemorySpace.SMEM),
            ],
            out_specs=pl.BlockSpec((1, Cout, TH, W), lambda n, r: (n, 0, r, 0)),
        ),
        compiler_params=pltpu.CompilerParams(
            dimension_semantics=("parallel", "parallel")),
    )(x_pad, w_taps)
    return out


# --------------------------------------------------------------------------
# GaborLayer-equivalent wrapper
# --------------------------------------------------------------------------
class GaborLayerPallas:
    """JAX/Pallas equivalent of the PyTorch GaborLayer (fixed Gabor conv)."""

    def __init__(self, in_channels, out_channels, kernel_size):
        self.in_channels = in_channels
        self.out_channels = out_channels
        self.kernel_size = kernel_size
        self.filters = create_gabor_filters(in_channels, out_channels, kernel_size)

    def __call__(self, x_nchw, *, row_tile=None):
        return gabor_conv2d(x_nchw, self.filters, row_tile=row_tile)


if __name__ == "__main__":
    # Small deterministic example consistent with the module (in_channels must
    # be 1 for the original .view() to be valid).
    N, Cin, H, W = 2, 1, 16, 16
    Cout, K = 4, 7

    key = jax.random.PRNGKey(0)
    x = jax.random.normal(key, (N, Cin, H, W), dtype=jnp.float32)

    layer = GaborLayerPallas(Cin, Cout, K)

    # Reference: same semantics as torch conv2d(x, filters, padding=K//2).
    ref = jax.lax.conv_general_dilated(
        x, layer.filters, window_strides=(1, 1),
        padding=[(K // 2, K // 2), (K // 2, K // 2)],
        dimension_numbers=("NCHW", "OIHW", "NCHW"),
    )

    # 1) Forced row tiling (grid = (N, 2)) -> exercises halo-row slicing.
    out_tiled = jax.block_until_ready(layer(x, row_tile=8))
    assert out_tiled.shape == (N, Cout, H, W)
    np.testing.assert_allclose(np.asarray(out_tiled), np.asarray(ref),
                               rtol=1e-4, atol=1e-4)

    # 2) Automatic tile selection (full-height tile at this small size).
    out_auto = jax.block_until_ready(layer(x))
    np.testing.assert_allclose(np.asarray(out_auto), np.asarray(ref),
                               rtol=1e-4, atol=1e-4)

    print("KERNEL_OK")
</pallas_src>

<mosaic_0001>
module attributes {stable_mosaic.version = 11 : i64} {
  func.func @kernel(%arg0: i32, %arg1: i32, %arg2: memref<1x22x22xf32, #tpu.memory_space<vmem>>, %arg3: memref<196xf32, #tpu.memory_space<smem>>, %arg4: memref<1x4x8x16xf32, #tpu.memory_space<vmem>>) attributes {dimension_semantics = [#tpu.dimension_semantics<parallel>, #tpu.dimension_semantics<parallel>], iteration_bounds = array<i64: 2, 2>, scalar_prefetch = 0 : i64, scratch_operands = 0 : i64, tpu.core_type = #tpu.core_type<tc>, window_params = [{transform_indices = @transform_0, window_bounds = array<i64: 1, 22, 22>}, {transform_indices = @transform_1, window_bounds = array<i64: 196>}, {transform_indices = @transform_2, window_bounds = array<i64: 1, 4, 8, 16>}]} {
    %c8_i32 = arith.constant 8 : i32
    %0 = arith.muli %arg1, %c8_i32 : i32
    %1 = tpu.assume_multiple %0, 8 : i32
    %cst = arith.constant 0.000000e+00 : f32
    %2 = vector.broadcast %cst : f32 to vector<8x16xf32>
    %cst_0 = arith.constant 0.000000e+00 : f32
    %3 = vector.broadcast %cst_0 : f32 to vector<8x16xf32>
    %cst_1 = arith.constant 0.000000e+00 : f32
    %4 = vector.broadcast %cst_1 : f32 to vector<8x16xf32>
    %cst_2 = arith.constant 0.000000e+00 : f32
    %5 = vector.broadcast %cst_2 : f32 to vector<8x16xf32>
    %c0_i32 = arith.constant 0 : i32
    %6 = arith.addi %1, %c0_i32 : i32
    %c0 = arith.constant 0 : index
    %7 = arith.index_cast %6 : i32 to index
    %c0_3 = arith.constant 0 : index
    %8 = vector.load %arg2[%c0, %7, %c0_3] : memref<1x22x22xf32, #tpu.memory_space<vmem>>, vector<1x8x22xf32>
    %9 = vector.shape_cast %8 : vector<1x8x22xf32> to vector<8x22xf32>
    %10 = vector.extract_strided_slice %9 {offsets = [0, 0], sizes = [8, 16], strides = [1, 1]} : vector<8x22xf32> to vector<8x16xf32>
    %c0_4 = arith.constant 0 : index
    %11 = memref.load %arg3[%c0_4] : memref<196xf32, #tpu.memory_space<smem>>
    %12 = vector.broadcast %11 : f32 to vector<8x16xf32>
    %13 = arith.mulf %12, %10 : vector<8x16xf32>
    %14 = arith.addf %2, %13 : vector<8x16xf32>
    %c49 = arith.constant 49 : index
    %15 = memref.load %arg3[%c49] : memref<196xf32, #tpu.memory_space<smem>>
    %16 = vector.broadcast %15 : f32 to vector<8x16xf32>
    %17 = arith.mulf %16, %10 : vector<8x16xf32>
    %18 = arith.addf %3, %17 : vector<8x16xf32>
    %c98 = arith.constant 98 : index
    %19 = memref.load %arg3[%c98] : memref<196xf32, #tpu.memory_space<smem>>
    %20 = vector.broadcast %19 : f32 to vector<8x16xf32>
    %21 = arith.mulf %20, %10 : vector<8x16xf32>
    %22 = arith.addf %4, %21 : vector<8x16xf32>
    %c147 = arith.constant 147 : index
    %23 = memref.load %arg3[%c147] : memref<196xf32, #tpu.memory_space<smem>>
    %24 = vector.broadcast %23 : f32 to vector<8x16xf32>
    %25 = arith.mulf %24, %10 : vector<8x16xf32>
    %26 = arith.addf %5, %25 : vector<8x16xf32>
    %27 = vector.extract_strided_slice %9 {offsets = [0, 1], sizes = [8, 16], strides = [1, 1]} : vector<8x22xf32> to vector<8x16xf32>
    %c1 = arith.constant 1 : index
    %28 = memref.load %arg3[%c1] : memref<196xf32, #tpu.memory_space<smem>>
    %29 = vector.broadcast %28 : f32 to vector<8x16xf32>
    %30 = arith.mulf %29, %27 : vector<8x16xf32>
    %31 = arith.addf %14, %30 : vector<8x16xf32>
    %c50 = arith.constant 50 : index
    %32 = memref.load %arg3[%c50] : memref<196xf32, #tpu.memory_space<smem>>
    %33 = vector.broadcast %32 : f32 to vector<8x16xf32>
    %34 = arith.mulf %33, %27 : vector<8x16xf32>
    %35 = arith.addf %18, %34 : vector<8x16xf32>
    %c99 = arith.constant 99 : index
    %36 = memref.load %arg3[%c99] : memref<196xf32, #tpu.memory_space<smem>>
    %37 = vector.broadcast %36 : f32 to vector<8x16xf32>
    %38 = arith.mulf %37, %27 : vector<8x16xf32>
    %39 = arith.addf %22, %38 : vector<8x16xf32>
    %c148 = arith.constant 148 : index
    %40 = memref.load %arg3[%c148] : memref<196xf32, #tpu.memory_space<smem>>
    %41 = vector.broadcast %40 : f32 to vector<8x16xf32>
    %42 = arith.mulf %41, %27 : vector<8x16xf32>
    %43 = arith.addf %26, %42 : vector<8x16xf32>
    %44 = vector.extract_strided_slice %9 {offsets = [0, 2], sizes = [8, 16], strides = [1, 1]} : vector<8x22xf32> to vector<8x16xf32>
    %c2 = arith.constant 2 : index
    %45 = memref.load %arg3[%c2] : memref<196xf32, #tpu.memory_space<smem>>
    %46 = vector.broadcast %45 : f32 to vector<8x16xf32>
    %47 = arith.mulf %46, %44 : vector<8x16xf32>
    %48 = arith.addf %31, %47 : vector<8x16xf32>
    %c51 = arith.constant 51 : index
    %49 = memref.load %arg3[%c51] : memref<196xf32, #tpu.memory_space<smem>>
    %50 = vector.broadcast %49 : f32 to vector<8x16xf32>
    %51 = arith.mulf %50, %44 : vector<8x16xf32>
    %52 = arith.addf %35, %51 : vector<8x16xf32>
    %c100 = arith.constant 100 : index
    %53 = memref.load %arg3[%c100] : memref<196xf32, #tpu.memory_space<smem>>
    %54 = vector.broadcast %53 : f32 to vector<8x16xf32>
    %55 = arith.mulf %54, %44 : vector<8x16xf32>
    %56 = arith.addf %39, %55 : vector<8x16xf32>
    %c149 = arith.constant 149 : index
    %57 = memref.load %arg3[%c149] : memref<196xf32, #tpu.memory_space<smem>>
    %58 = vector.broadcast %57 : f32 to vector<8x16xf32>
    %59 = arith.mulf %58, %44 : vector<8x16xf32>
    %60 = arith.addf %43, %59 : vector<8x16xf32>
    %61 = vector.extract_strided_slice %9 {offsets = [0, 3], sizes = [8, 16], strides = [1, 1]} : vector<8x22xf32> to vector<8x16xf32>
    %c3 = arith.constant 3 : index
    %62 = memref.load %arg3[%c3] : memref<196xf32, #tpu.memory_space<smem>>
    %63 = vector.broadcast %62 : f32 to vector<8x16xf32>
    %64 = arith.mulf %63, %61 : vector<8x16xf32>
    %65 = arith.addf %48, %64 : vector<8x16xf32>
    %c52 = arith.constant 52 : index
    %66 = memref.load %arg3[%c52] : memref<196xf32, #tpu.memory_space<smem>>
    %67 = vector.broadcast %66 : f32 to vector<8x16xf32>
    %68 = arith.mulf %67, %61 : vector<8x16xf32>
    %69 = arith.addf %52, %68 : vector<8x16xf32>
    %c101 = arith.constant 101 : index
    %70 = memref.load %arg3[%c101] : memref<196xf32, #tpu.memory_space<smem>>
    %71 = vector.broadcast %70 : f32 to vector<8x16xf32>
    %72 = arith.mulf %71, %61 : vector<8x16xf32>
    %73 = arith.addf %56, %72 : vector<8x16xf32>
    %c150 = arith.constant 150 : index
    %74 = memref.load %arg3[%c150] : memref<196xf32, #tpu.memory_space<smem>>
    %75 = vector.broadcast %74 : f32 to vector<8x16xf32>
    %76 = arith.mulf %75, %61 : vector<8x16xf32>
    %77 = arith.addf %60, %76 : vector<8x16xf32>
    %78 = vector.extract_strided_slice %9 {offsets = [0, 4], sizes = [8, 16], strides = [1, 1]} : vector<8x22xf32> to vector<8x16xf32>
    %c4 = arith.constant 4 : index
    %79 = memref.load %arg3[%c4] : memref<196xf32, #tpu.memory_space<smem>>
    %80 = vector.broadcast %79 : f32 to vector<8x16xf32>
    %81 = arith.mulf %80, %78 : vector<8x16xf32>
    %82 = arith.addf %65, %81 : vector<8x16xf32>
    %c53 = arith.constant 53 : index
    %83 = memref.load %arg3[%c53] : memref<196xf32, #tpu.memory_space<smem>>
    %84 = vector.broadcast %83 : f32 to vector<8x16xf32>
    %85 = arith.mulf %84, %78 : vector<8x16xf32>
    %86 = arith.addf %69, %85 : vector<8x16xf32>
    %c102 = arith.constant 102 : index
    %87 = memref.load %arg3[%c102] : memref<196xf32, #tpu.memory_space<smem>>
    %88 = vector.broadcast %87 : f32 to vector<8x16xf32>
    %89 = arith.mulf %88, %78 : vector<8x16xf32>
    %90 = arith.addf %73, %89 : vector<8x16xf32>
    %c151 = arith.constant 151 : index
    %91 = memref.load %arg3[%c151] : memref<196xf32, #tpu.memory_space<smem>>
    %92 = vector.broadcast %91 : f32 to vector<8x16xf32>
    %93 = arith.mulf %92, %78 : vector<8x16xf32>
    %94 = arith.addf %77, %93 : vector<8x16xf32>
    %95 = vector.extract_strided_slice %9 {offsets = [0, 5], sizes = [8, 16], strides = [1, 1]} : vector<8x22xf32> to vector<8x16xf32>
    %c5 = arith.constant 5 : index
    %96 = memref.load %arg3[%c5] : memref<196xf32, #tpu.memory_space<smem>>
    %97 = vector.broadcast %96 : f32 to vector<8x16xf32>
    %98 = arith.mulf %97, %95 : vector<8x16xf32>
    %99 = arith.addf %82, %98 : vector<8x16xf32>
    %c54 = arith.constant 54 : index
    %100 = memref.load %arg3[%c54] : memref<196xf32, #tpu.memory_space<smem>>
    %101 = vector.broadcast %100 : f32 to vector<8x16xf32>
    %102 = arith.mulf %101, %95 : vector<8x16xf32>
    %103 = arith.addf %86, %102 : vector<8x16xf32>
    %c103 = arith.constant 103 : index
    %104 = memref.load %arg3[%c103] : memref<196xf32, #tpu.memory_space<smem>>
    %105 = vector.broadcast %104 : f32 to vector<8x16xf32>
    %106 = arith.mulf %105, %95 : vector<8x16xf32>
    %107 = arith.addf %90, %106 : vector<8x16xf32>
    %c152 = arith.constant 152 : index
    %108 = memref.load %arg3[%c152] : memref<196xf32, #tpu.memory_space<smem>>
    %109 = vector.broadcast %108 : f32 to vector<8x16xf32>
    %110 = arith.mulf %109, %95 : vector<8x16xf32>
    %111 = arith.addf %94, %110 : vector<8x16xf32>
    %112 = vector.extract_strided_slice %9 {offsets = [0, 6], sizes = [8, 16], strides = [1, 1]} : vector<8x22xf32> to vector<8x16xf32>
    %c6 = arith.constant 6 : index
    %113 = memref.load %arg3[%c6] : memref<196xf32, #tpu.memory_space<smem>>
    %114 = vector.broadcast %113 : f32 to vector<8x16xf32>
    %115 = arith.mulf %114, %112 : vector<8x16xf32>
    %116 = arith.addf %99, %115 : vector<8x16xf32>
    %c55 = arith.constant 55 : index
    %117 = memref.load %arg3[%c55] : memref<196xf32, #tpu.memory_space<smem>>
    %118 = vector.broadcast %117 : f32 to vector<8x16xf32>
    %119 = arith.mulf %118, %112 : vector<8x16xf32>
    %120 = arith.addf %103, %119 : vector<8x16xf32>
    %c104 = arith.constant 104 : index
    %121 = memref.load %arg3[%c104] : memref<196xf32, #tpu.memory_space<smem>>
    %122 = vector.broadcast %121 : f32 to vector<8x16xf32>
    %123 = arith.mulf %122, %112 : vector<8x16xf32>
    %124 = arith.addf %107, %123 : vector<8x16xf32>
    %c153 = arith.constant 153 : index
    %125 = memref.load %arg3[%c153] : memref<196xf32, #tpu.memory_space<smem>>
    %126 = vector.broadcast %125 : f32 to vector<8x16xf32>
    %127 = arith.mulf %126, %112 : vector<8x16xf32>
    %128 = arith.addf %111, %127 : vector<8x16xf32>
    %c1_i32 = arith.constant 1 : i32
    %129 = arith.addi %1, %c1_i32 : i32
    %c0_5 = arith.constant 0 : index
    %130 = arith.index_cast %129 : i32 to index
    %c0_6 = arith.constant 0 : index
    %131 = vector.load %arg2[%c0_5, %130, %c0_6] : memref<1x22x22xf32, #tpu.memory_space<vmem>>, vector<1x8x22xf32>
    %132 = vector.shape_cast %131 : vector<1x8x22xf32> to vector<8x22xf32>
    %133 = vector.extract_strided_slice %132 {offsets = [0, 0], sizes = [8, 16], strides = [1, 1]} : vector<8x22xf32> to vector<8x16xf32>
    %c7 = arith.constant 7 : index
    %134 = memref.load %arg3[%c7] : memref<196xf32, #tpu.memory_space<smem>>
    %135 = vector.broadcast %134 : f32 to vector<8x16xf32>
    %136 = arith.mulf %135, %133 : vector<8x16xf32>
    %137 = arith.addf %116, %136 : vector<8x16xf32>
    %c56 = arith.constant 56 : index
    %138 = memref.load %arg3[%c56] : memref<196xf32, #tpu.memory_space<smem>>
    %139 = vector.broadcast %138 : f32 to vector<8x16xf32>
    %140 = arith.mulf %139, %133 : vector<8x16xf32>
    %141 = arith.addf %120, %140 : vector<8x16xf32>
    %c105 = arith.constant 105 : index
    %142 = memref.load %arg3[%c105] : memref<196xf32, #tpu.memory_space<smem>>
    %143 = vector.broadcast %142 : f32 to vector<8x16xf32>
    %144 = arith.mulf %143, %133 : vector<8x16xf32>
    %145 = arith.addf %124, %144 : vector<8x16xf32>
    %c154 = arith.constant 154 : index
    %146 = memref.load %arg3[%c154] : memref<196xf32, #tpu.memory_space<smem>>
    %147 = vector.broadcast %146 : f32 to vector<8x16xf32>
    %148 = arith.mulf %147, %133 : vector<8x16xf32>
    %149 = arith.addf %128, %148 : vector<8x16xf32>
    %150 = vector.extract_strided_slice %132 {offsets = [0, 1], sizes = [8, 16], strides = [1, 1]} : vector<8x22xf32> to vector<8x16xf32>
    %c8 = arith.constant 8 : index
    %151 = memref.load %arg3[%c8] : memref<196xf32, #tpu.memory_space<smem>>
    %152 = vector.broadcast %151 : f32 to vector<8x16xf32>
    %153 = arith.mulf %152, %150 : vector<8x16xf32>
    %154 = arith.addf %137, %153 : vector<8x16xf32>
    %c57 = arith.constant 57 : index
    %155 = memref.load %arg3[%c57] : memref<196xf32, #tpu.memory_space<smem>>
    %156 = vector.broadcast %155 : f32 to vector<8x16xf32>
    %157 = arith.mulf %156, %150 : vector<8x16xf32>
    %158 = arith.addf %141, %157 : vector<8x16xf32>
    %c106 = arith.constant 106 : index
    %159 = memref.load %arg3[%c106] : memref<196xf32, #tpu.memory_space<smem>>
    %160 = vector.broadcast %159 : f32 to vector<8x16xf32>
    %161 = arith.mulf %160, %150 : vector<8x16xf32>
    %162 = arith.addf %145, %161 : vector<8x16xf32>
    %c155 = arith.constant 155 : index
    %163 = memref.load %arg3[%c155] : memref<196xf32, #tpu.memory_space<smem>>
    %164 = vector.broadcast %163 : f32 to vector<8x16xf32>
    %165 = arith.mulf %164, %150 : vector<8x16xf32>
    %166 = arith.addf %149, %165 : vector<8x16xf32>
    %167 = vector.extract_strided_slice %132 {offsets = [0, 2], sizes = [8, 16], strides = [1, 1]} : vector<8x22xf32> to vector<8x16xf32>
    %c9 = arith.constant 9 : index
    %168 = memref.load %arg3[%c9] : memref<196xf32, #tpu.memory_space<smem>>
    %169 = vector.broadcast %168 : f32 to vector<8x16xf32>
    %170 = arith.mulf %169, %167 : vector<8x16xf32>
    %171 = arith.addf %154, %170 : vector<8x16xf32>
    %c58 = arith.constant 58 : index
    %172 = memref.load %arg3[%c58] : memref<196xf32, #tpu.memory_space<smem>>
    %173 = vector.broadcast %172 : f32 to vector<8x16xf32>
    %174 = arith.mulf %173, %167 : vector<8x16xf32>
    %175 = arith.addf %158, %174 : vector<8x16xf32>
    %c107 = arith.constant 107 : index
    %176 = memref.load %arg3[%c107] : memref<196xf32, #tpu.memory_space<smem>>
    %177 = vector.broadcast %176 : f32 to vector<8x16xf32>
    %178 = arith.mulf %177, %167 : vector<8x16xf32>
    %179 = arith.addf %162, %178 : vector<8x16xf32>
    %c156 = arith.constant 156 : index
    %180 = memref.load %arg3[%c156] : memref<196xf32, #tpu.memory_space<smem>>
    %181 = vector.broadcast %180 : f32 to vector<8x16xf32>
    %182 = arith.mulf %181, %167 : vector<8x16xf32>
    %183 = arith.addf %166, %182 : vector<8x16xf32>
    %184 = vector.extract_strided_slice %132 {offsets = [0, 3], sizes = [8, 16], strides = [1, 1]} : vector<8x22xf32> to vector<8x16xf32>
    %c10 = arith.constant 10 : index
    %185 = memref.load %arg3[%c10] : memref<196xf32, #tpu.memory_space<smem>>
    %186 = vector.broadcast %185 : f32 to vector<8x16xf32>
    %187 = arith.mulf %186, %184 : vector<8x16xf32>
    %188 = arith.addf %171, %187 : vector<8x16xf32>
    %c59 = arith.constant 59 : index
    %189 = memref.load %arg3[%c59] : memref<196xf32, #tpu.memory_space<smem>>
    %190 = vector.broadcast %189 : f32 to vector<8x16xf32>
    %191 = arith.mulf %190, %184 : vector<8x16xf32>
    %192 = arith.addf %175, %191 : vector<8x16xf32>
    %c108 = arith.constant 108 : index
    %193 = memref.load %arg3[%c108] : memref<196xf32, #tpu.memory_space<smem>>
    %194 = vector.broadcast %193 : f32 to vector<8x16xf32>
    %195 = arith.mulf %194, %184 : vector<8x16xf32>
    %196 = arith.addf %179, %195 : vector<8x16xf32>
    %c157 = arith.constant 157 : index
    %197 = memref.load %arg3[%c157] : memref<196xf32, #tpu.memory_space<smem>>
    %198 = vector.broadcast %197 : f32 to vector<8x16xf32>
    %199 = arith.mulf %198, %184 : vector<8x16xf32>
    %200 = arith.addf %183, %199 : vector<8x16xf32>
    %201 = vector.extract_strided_slice %132 {offsets = [0, 4], sizes = [8, 16], strides = [1, 1]} : vector<8x22xf32> to vector<8x16xf32>
    %c11 = arith.constant 11 : index
    %202 = memref.load %arg3[%c11] : memref<196xf32, #tpu.memory_space<smem>>
    %203 = vector.broadcast %202 : f32 to vector<8x16xf32>
    %204 = arith.mulf %203, %201 : vector<8x16xf32>
    %205 = arith.addf %188, %204 : vector<8x16xf32>
    %c60 = arith.constant 60 : index
    %206 = memref.load %arg3[%c60] : memref<196xf32, #tpu.memory_space<smem>>
    %207 = vector.broadcast %206 : f32 to vector<8x16xf32>
    %208 = arith.mulf %207, %201 : vector<8x16xf32>
    %209 = arith.addf %192, %208 : vector<8x16xf32>
    %c109 = arith.constant 109 : index
    %210 = memref.load %arg3[%c109] : memref<196xf32, #tpu.memory_space<smem>>
    %211 = vector.broadcast %210 : f32 to vector<8x16xf32>
    %212 = arith.mulf %211, %201 : vector<8x16xf32>
    %213 = arith.addf %196, %212 : vector<8x16xf32>
    %c158 = arith.constant 158 : index
    %214 = memref.load %arg3[%c158] : memref<196xf32, #tpu.memory_space<smem>>
    %215 = vector.broadcast %214 : f32 to vector<8x16xf32>
    %216 = arith.mulf %215, %201 : vector<8x16xf32>
    %217 = arith.addf %200, %216 : vector<8x16xf32>
    %218 = vector.extract_strided_slice %132 {offsets = [0, 5], sizes = [8, 16], strides = [1, 1]} : vector<8x22xf32> to vector<8x16xf32>
    %c12 = arith.constant 12 : index
    %219 = memref.load %arg3[%c12] : memref<196xf32, #tpu.memory_space<smem>>
    %220 = vector.broadcast %219 : f32 to vector<8x16xf32>
    %221 = arith.mulf %220, %218 : vector<8x16xf32>
    %222 = arith.addf %205, %221 : vector<8x16xf32>
    %c61 = arith.constant 61 : index
    %223 = memref.load %arg3[%c61] : memref<196xf32, #tpu.memory_space<smem>>
    %224 = vector.broadcast %223 : f32 to vector<8x16xf32>
    %225 = arith.mulf %224, %218 : vector<8x16xf32>
    %226 = arith.addf %209, %225 : vector<8x16xf32>
    %c110 = arith.constant 110 : index
    %227 = memref.load %arg3[%c110] : memref<196xf32, #tpu.memory_space<smem>>
    %228 = vector.broadcast %227 : f32 to vector<8x16xf32>
    %229 = arith.mulf %228, %218 : vector<8x16xf32>
    %230 = arith.addf %213, %229 : vector<8x16xf32>
    %c159 = arith.constant 159 : index
    %231 = memref.load %arg3[%c159] : memref<196xf32, #tpu.memory_space<smem>>
    %232 = vector.broadcast %231 : f32 to vector<8x16xf32>
    %233 = arith.mulf %232, %218 : vector<8x16xf32>
    %234 = arith.addf %217, %233 : vector<8x16xf32>
    %235 = vector.extract_strided_slice %132 {offsets = [0, 6], sizes = [8, 16], strides = [1, 1]} : vector<8x22xf32> to vector<8x16xf32>
    %c13 = arith.constant 13 : index
    %236 = memref.load %arg3[%c13] : memref<196xf32, #tpu.memory_space<smem>>
    %237 = vector.broadcast %236 : f32 to vector<8x16xf32>
    %238 = arith.mulf %237, %235 : vector<8x16xf32>
    %239 = arith.addf %222, %238 : vector<8x16xf32>
    %c62 = arith.constant 62 : index
    %240 = memref.load %arg3[%c62] : memref<196xf32, #tpu.memory_space<smem>>
    %241 = vector.broadcast %240 : f32 to vector<8x16xf32>
    %242 = arith.mulf %241, %235 : vector<8x16xf32>
    %243 = arith.addf %226, %242 : vector<8x16xf32>
    %c111 = arith.constant 111 : index
    %244 = memref.load %arg3[%c111] : memref<196xf32, #tpu.memory_space<smem>>
    %245 = vector.broadcast %244 : f32 to vector<8x16xf32>
    %246 = arith.mulf %245, %235 : vector<8x16xf32>
    %247 = arith.addf %230, %246 : vector<8x16xf32>
    %c160 = arith.constant 160 : index
    %248 = memref.load %arg3[%c160] : memref<196xf32, #tpu.memory_space<smem>>
    %249 = vector.broadcast %248 : f32 to vector<8x16xf32>
    %250 = arith.mulf %249, %235 : vector<8x16xf32>
    %251 = arith.addf %234, %250 : vector<8x16xf32>
    %c2_i32 = arith.constant 2 : i32
    %252 = arith.addi %1, %c2_i32 : i32
    %c0_7 = arith.constant 0 : index
    %253 = arith.index_cast %252 : i32 to index
    %c0_8 = arith.constant 0 : index
    %254 = vector.load %arg2[%c0_7, %253, %c0_8] : memref<1x22x22xf32, #tpu.memory_space<vmem>>, vector<1x8x22xf32>
    %255 = vector.shape_cast %254 : vector<1x8x22xf32> to vector<8x22xf32>
    %256 = vector.extract_strided_slice %255 {offsets = [0, 0], sizes = [8, 16], strides = [1, 1]} : vector<8x22xf32> to vector<8x16xf32>
    %c14 = arith.constant 14 : index
    %257 = memref.load %arg3[%c14] : memref<196xf32, #tpu.memory_space<smem>>
    %258 = vector.broadcast %257 : f32 to vector<8x16xf32>
    %259 = arith.mulf %258, %256 : vector<8x16xf32>
    %260 = arith.addf %239, %259 : vector<8x16xf32>
    %c63 = arith.constant 63 : index
    %261 = memref.load %arg3[%c63] : memref<196xf32, #tpu.memory_space<smem>>
    %262 = vector.broadcast %261 : f32 to vector<8x16xf32>
    %263 = arith.mulf %262, %256 : vector<8x16xf32>
    %264 = arith.addf %243, %263 : vector<8x16xf32>
    %c112 = arith.constant 112 : index
    %265 = memref.load %arg3[%c112] : memref<196xf32, #tpu.memory_space<smem>>
    %266 = vector.broadcast %265 : f32 to vector<8x16xf32>
    %267 = arith.mulf %266, %256 : vector<8x16xf32>
    %268 = arith.addf %247, %267 : vector<8x16xf32>
    %c161 = arith.constant 161 : index
    %269 = memref.load %arg3[%c161] : memref<196xf32, #tpu.memory_space<smem>>
    %270 = vector.broadcast %269 : f32 to vector<8x16xf32>
    %271 = arith.mulf %270, %256 : vector<8x16xf32>
    %272 = arith.addf %251, %271 : vector<8x16xf32>
    %273 = vector.extract_strided_slice %255 {offsets = [0, 1], sizes = [8, 16], strides = [1, 1]} : vector<8x22xf32> to vector<8x16xf32>
    %c15 = arith.constant 15 : index
    %274 = memref.load %arg3[%c15] : memref<196xf32, #tpu.memory_space<smem>>
    %275 = vector.broadcast %274 : f32 to vector<8x16xf32>
    %276 = arith.mulf %275, %273 : vector<8x16xf32>
    %277 = arith.addf %260, %276 : vector<8x16xf32>
    %c64 = arith.constant 64 : index
    %278 = memref.load %arg3[%c64] : memref<196xf32, #tpu.memory_space<smem>>
    %279 = vector.broadcast %278 : f32 to vector<8x16xf32>
    %280 = arith.mulf %279, %273 : vector<8x16xf32>
    %281 = arith.addf %264, %280 : vector<8x16xf32>
    %c113 = arith.constant 113 : index
    %282 = memref.load %arg3[%c113] : memref<196xf32, #tpu.memory_space<smem>>
    %283 = vector.broadcast %282 : f32 to vector<8x16xf32>
    %284 = arith.mulf %283, %273 : vector<8x16xf32>
    %285 = arith.addf %268, %284 : vector<8x16xf32>
    %c162 = arith.constant 162 : index
    %286 = memref.load %arg3[%c162] : memref<196xf32, #tpu.memory_space<smem>>
    %287 = vector.broadcast %286 : f32 to vector<8x16xf32>
    %288 = arith.mulf %287, %273 : vector<8x16xf32>
    %289 = arith.addf %272, %288 : vector<8x16xf32>
    %290 = vector.extract_strided_slice %255 {offsets = [0, 2], sizes = [8, 16], strides = [1, 1]} : vector<8x22xf32> to vector<8x16xf32>
    %c16 = arith.constant 16 : index
    %291 = memref.load %arg3[%c16] : memref<196xf32, #tpu.memory_space<smem>>
    %292 = vector.broadcast %291 : f32 to vector<8x16xf32>
    %293 = arith.mulf %292, %290 : vector<8x16xf32>
    %294 = arith.addf %277, %293 : vector<8x16xf32>
    %c65 = arith.constant 65 : index
    %295 = memref.load %arg3[%c65] : memref<196xf32, #tpu.memory_space<smem>>
    %296 = vector.broadcast %295 : f32 to vector<8x16xf32>
    %297 = arith.mulf %296, %290 : vector<8x16xf32>
    %298 = arith.addf %281, %297 : vector<8x16xf32>
    %c114 = arith.constant 114 : index
    %299 = memref.load %arg3[%c114] : memref<196xf32, #tpu.memory_space<smem>>
    %300 = vector.broadcast %299 : f32 to vector<8x16xf32>
    %301 = arith.mulf %300, %290 : vector<8x16xf32>
    %302 = arith.addf %285, %301 : vector<8x16xf32>
    %c163 = arith.constant 163 : index
    %303 = memref.load %arg3[%c163] : memref<196xf32, #tpu.memory_space<smem>>
    %304 = vector.broadcast %303 : f32 to vector<8x16xf32>
    %305 = arith.mulf %304, %290 : vector<8x16xf32>
    %306 = arith.addf %289, %305 : vector<8x16xf32>
    %307 = vector.extract_strided_slice %255 {offsets = [0, 3], sizes = [8, 16], strides = [1, 1]} : vector<8x22xf32> to vector<8x16xf32>
    %c17 = arith.constant 17 : index
    %308 = memref.load %arg3[%c17] : memref<196xf32, #tpu.memory_space<smem>>
    %309 = vector.broadcast %308 : f32 to vector<8x16xf32>
    %310 = arith.mulf %309, %307 : vector<8x16xf32>
    %311 = arith.addf %294, %310 : vector<8x16xf32>
    %c66 = arith.constant 66 : index
    %312 = memref.load %arg3[%c66] : memref<196xf32, #tpu.memory_space<smem>>
    %313 = vector.broadcast %312 : f32 to vector<8x16xf32>
    %314 = arith.mulf %313, %307 : vector<8x16xf32>
    %315 = arith.addf %298, %314 : vector<8x16xf32>
    %c115 = arith.constant 115 : index
    %316 = memref.load %arg3[%c115] : memref<196xf32, #tpu.memory_space<smem>>
    %317 = vector.broadcast %316 : f32 to vector<8x16xf32>
    %318 = arith.mulf %317, %307 : vector<8x16xf32>
    %319 = arith.addf %302, %318 : vector<8x16xf32>
    %c164 = arith.constant 164 : index
    %320 = memref.load %arg3[%c164] : memref<196xf32, #tpu.memory_space<smem>>
    %321 = vector.broadcast %320 : f32 to vector<8x16xf32>
    %322 = arith.mulf %321, %307 : vector<8x16xf32>
    %323 = arith.addf %306, %322 : vector<8x16xf32>
    %324 = vector.extract_strided_slice %255 {offsets = [0, 4], sizes = [8, 16], strides = [1, 1]} : vector<8x22xf32> to vector<8x16xf32>
    %c18 = arith.constant 18 : index
    %325 = memref.load %arg3[%c18] : memref<196xf32, #tpu.memory_space<smem>>
    %326 = vector.broadcast %325 : f32 to vector<8x16xf32>
    %327 = arith.mulf %326, %324 : vector<8x16xf32>
    %328 = arith.addf %311, %327 : vector<8x16xf32>
    %c67 = arith.constant 67 : index
    %329 = memref.load %arg3[%c67] : memref<196xf32, #tpu.memory_space<smem>>
    %330 = vector.broadcast %329 : f32 to vector<8x16xf32>
    %331 = arith.mulf %330, %324 : vector<8x16xf32>
    %332 = arith.addf %315, %331 : vector<8x16xf32>
    %c116 = arith.constant 116 : index
    %333 = memref.load %arg3[%c116] : memref<196xf32, #tpu.memory_space<smem>>
    %334 = vector.broadcast %333 : f32 to vector<8x16xf32>
    %335 = arith.mulf %334, %324 : vector<8x16xf32>
    %336 = arith.addf %319, %335 : vector<8x16xf32>
    %c165 = arith.constant 165 : index
    %337 = memref.load %arg3[%c165] : memref<196xf32, #tpu.memory_space<smem>>
    %338 = vector.broadcast %337 : f32 to vector<8x16xf32>
    %339 = arith.mulf %338, %324 : vector<8x16xf32>
    %340 = arith.addf %323, %339 : vector<8x16xf32>
    %341 = vector.extract_strided_slice %255 {offsets = [0, 5], sizes = [8, 16], strides = [1, 1]} : vector<8x22xf32> to vector<8x16xf32>
    %c19 = arith.constant 19 : index
    %342 = memref.load %arg3[%c19] : memref<196xf32, #tpu.memory_space<smem>>
    %343 = vector.broadcast %342 : f32 to vector<8x16xf32>
    %344 = arith.mulf %343, %341 : vector<8x16xf32>
    %345 = arith.addf %328, %344 : vector<8x16xf32>
    %c68 = arith.constant 68 : index
    %346 = memref.load %arg3[%c68] : memref<196xf32, #tpu.memory_space<smem>>
    %347 = vector.broadcast %346 : f32 to vector<8x16xf32>
    %348 = arith.mulf %347, %341 : vector<8x16xf32>
    %349 = arith.addf %332, %348 : vector<8x16xf32>
    %c117 = arith.constant 117 : index
    %350 = memref.load %arg3[%c117] : memref<196xf32, #tpu.memory_space<smem>>
    %351 = vector.broadcast %350 : f32 to vector<8x16xf32>
    %352 = arith.mulf %351, %341 : vector<8x16xf32>
    %353 = arith.addf %336, %352 : vector<8x16xf32>
    %c166 = arith.constant 166 : index
    %354 = memref.load %arg3[%c166] : memref<196xf32, #tpu.memory_space<smem>>
    %355 = vector.broadcast %354 : f32 to vector<8x16xf32>
    %356 = arith.mulf %355, %341 : vector<8x16xf32>
    %357 = arith.addf %340, %356 : vector<8x16xf32>
    %358 = vector.extract_strided_slice %255 {offsets = [0, 6], sizes = [8, 16], strides = [1, 1]} : vector<8x22xf32> to vector<8x16xf32>
    %c20 = arith.constant 20 : index
    %359 = memref.load %arg3[%c20] : memref<196xf32, #tpu.memory_space<smem>>
    %360 = vector.broadcast %359 : f32 to vector<8x16xf32>
    %361 = arith.mulf %360, %358 : vector<8x16xf32>
    %362 = arith.addf %345, %361 : vector<8x16xf32>
    %c69 = arith.constant 69 : index
    %363 = memref.load %arg3[%c69] : memref<196xf32, #tpu.memory_space<smem>>
    %364 = vector.broadcast %363 : f32 to vector<8x16xf32>
    %365 = arith.mulf %364, %358 : vector<8x16xf32>
    %366 = arith.addf %349, %365 : vector<8x16xf32>
    %c118 = arith.constant 118 : index
    %367 = memref.load %arg3[%c118] : memref<196xf32, #tpu.memory_space<smem>>
    %368 = vector.broadcast %367 : f32 to vector<8x16xf32>
    %369 = arith.mulf %368, %358 : vector<8x16xf32>
    %370 = arith.addf %353, %369 : vector<8x16xf32>
    %c167 = arith.constant 167 : index
    %371 = memref.load %arg3[%c167] : memref<196xf32, #tpu.memory_space<smem>>
    %372 = vector.broadcast %371 : f32 to vector<8x16xf32>
    %373 = arith.mulf %372, %358 : vector<8x16xf32>
    %374 = arith.addf %357, %373 : vector<8x16xf32>
    %c3_i32 = arith.constant 3 : i32
    %375 = arith.addi %1, %c3_i32 : i32
    %c0_9 = arith.constant 0 : index
    %376 = arith.index_cast %375 : i32 to index
    %c0_10 = arith.constant 0 : index
    %377 = vector.load %arg2[%c0_9, %376, %c0_10] : memref<1x22x22xf32, #tpu.memory_space<vmem>>, vector<1x8x22xf32>
    %378 = vector.shape_cast %377 : vector<1x8x22xf32> to vector<8x22xf32>
    %379 = vector.extract_strided_slice %378 {offsets = [0, 0], sizes = [8, 16], strides = [1, 1]} : vector<8x22xf32> to vector<8x16xf32>
    %c21 = arith.constant 21 : index
    %380 = memref.load %arg3[%c21] : memref<196xf32, #tpu.memory_space<smem>>
    %381 = vector.broadcast %380 : f32 to vector<8x16xf32>
    %382 = arith.mulf %381, %379 : vector<8x16xf32>
    %383 = arith.addf %362, %382 : vector<8x16xf32>
    %c70 = arith.constant 70 : index
    %384 = memref.load %arg3[%c70] : memref<196xf32, #tpu.memory_space<smem>>
    %385 = vector.broadcast %384 : f32 to vector<8x16xf32>
    %386 = arith.mulf %385, %379 : vector<8x16xf32>
    %387 = arith.addf %366, %386 : vector<8x16xf32>
    %c119 = arith.constant 119 : index
    %388 = memref.load %arg3[%c119] : memref<196xf32, #tpu.memory_space<smem>>
    %389 = vector.broadcast %388 : f32 to vector<8x16xf32>
    %390 = arith.mulf %389, %379 : vector<8x16xf32>
    %391 = arith.addf %370, %390 : vector<8x16xf32>
    %c168 = arith.constant 168 : index
    %392 = memref.load %arg3[%c168] : memref<196xf32, #tpu.memory_space<smem>>
    %393 = vector.broadcast %392 : f32 to vector<8x16xf32>
    %394 = arith.mulf %393, %379 : vector<8x16xf32>
    %395 = arith.addf %374, %394 : vector<8x16xf32>
    %396 = vector.extract_strided_slice %378 {offsets = [0, 1], sizes = [8, 16], strides = [1, 1]} : vector<8x22xf32> to vector<8x16xf32>
    %c22 = arith.constant 22 : index
    %397 = memref.load %arg3[%c22] : memref<196xf32, #tpu.memory_space<smem>>
    %398 = vector.broadcast %397 : f32 to vector<8x16xf32>
    %399 = arith.mulf %398, %396 : vector<8x16xf32>
    %400 = arith.addf %383, %399 : vector<8x16xf32>
    %c71 = arith.constant 71 : index
    %401 = memref.load %arg3[%c71] : memref<196xf32, #tpu.memory_space<smem>>
    %402 = vector.broadcast %401 : f32 to vector<8x16xf32>
    %403 = arith.mulf %402, %396 : vector<8x16xf32>
    %404 = arith.addf %387, %403 : vector<8x16xf32>
    %c120 = arith.constant 120 : index
    %405 = memref.load %arg3[%c120] : memref<196xf32, #tpu.memory_space<smem>>
    %406 = vector.broadcast %405 : f32 to vector<8x16xf32>
    %407 = arith.mulf %406, %396 : vector<8x16xf32>
    %408 = arith.addf %391, %407 : vector<8x16xf32>
    %c169 = arith.constant 169 : index
    %409 = memref.load %arg3[%c169] : memref<196xf32, #tpu.memory_space<smem>>
    %410 = vector.broadcast %409 : f32 to vector<8x16xf32>
    %411 = arith.mulf %410, %396 : vector<8x16xf32>
    %412 = arith.addf %395, %411 : vector<8x16xf32>
    %413 = vector.extract_strided_slice %378 {offsets = [0, 2], sizes = [8, 16], strides = [1, 1]} : vector<8x22xf32> to vector<8x16xf32>
    %c23 = arith.constant 23 : index
    %414 = memref.load %arg3[%c23] : memref<196xf32, #tpu.memory_space<smem>>
    %415 = vector.broadcast %414 : f32 to vector<8x16xf32>
    %416 = arith.mulf %415, %413 : vector<8x16xf32>
    %417 = arith.addf %400, %416 : vector<8x16xf32>
    %c72 = arith.constant 72 : index
    %418 = memref.load %arg3[%c72] : memref<196xf32, #tpu.memory_space<smem>>
    %419 = vector.broadcast %418 : f32 to vector<8x16xf32>
    %420 = arith.mulf %419, %413 : vector<8x16xf32>
    %421 = arith.addf %404, %420 : vector<8x16xf32>
    %c121 = arith.constant 121 : index
    %422 = memref.load %arg3[%c121] : memref<196xf32, #tpu.memory_space<smem>>
    %423 = vector.broadcast %422 : f32 to vector<8x16xf32>
    %424 = arith.mulf %423, %413 : vector<8x16xf32>
    %425 = arith.addf %408, %424 : vector<8x16xf32>
    %c170 = arith.constant 170 : index
    %426 = memref.load %arg3[%c170] : memref<196xf32, #tpu.memory_space<smem>>
    %427 = vector.broadcast %426 : f32 to vector<8x16xf32>
    %428 = arith.mulf %427, %413 : vector<8x16xf32>
    %429 = arith.addf %412, %428 : vector<8x16xf32>
    %430 = vector.extract_strided_slice %378 {offsets = [0, 3], sizes = [8, 16], strides = [1, 1]} : vector<8x22xf32> to vector<8x16xf32>
    %c24 = arith.constant 24 : index
    %431 = memref.load %arg3[%c24] : memref<196xf32, #tpu.memory_space<smem>>
    %432 = vector.broadcast %431 : f32 to vector<8x16xf32>
    %433 = arith.mulf %432, %430 : vector<8x16xf32>
    %434 = arith.addf %417, %433 : vector<8x16xf32>
    %c73 = arith.constant 73 : index
    %435 = memref.load %arg3[%c73] : memref<196xf32, #tpu.memory_space<smem>>
    %436 = vector.broadcast %435 : f32 to vector<8x16xf32>
    %437 = arith.mulf %436, %430 : vector<8x16xf32>
    %438 = arith.addf %421, %437 : vector<8x16xf32>
    %c122 = arith.constant 122 : index
    %439 = memref.load %arg3[%c122] : memref<196xf32, #tpu.memory_space<smem>>
    %440 = vector.broadcast %439 : f32 to vector<8x16xf32>
    %441 = arith.mulf %440, %430 : vector<8x16xf32>
    %442 = arith.addf %425, %441 : vector<8x16xf32>
    %c171 = arith.constant 171 : index
    %443 = memref.load %arg3[%c171] : memref<196xf32, #tpu.memory_space<smem>>
    %444 = vector.broadcast %443 : f32 to vector<8x16xf32>
    %445 = arith.mulf %444, %430 : vector<8x16xf32>
    %446 = arith.addf %429, %445 : vector<8x16xf32>
    %447 = vector.extract_strided_slice %378 {offsets = [0, 4], sizes = [8, 16], strides = [1, 1]} : vector<8x22xf32> to vector<8x16xf32>
    %c25 = arith.constant 25 : index
    %448 = memref.load %arg3[%c25] : memref<196xf32, #tpu.memory_space<smem>>
    %449 = vector.broadcast %448 : f32 to vector<8x16xf32>
    %450 = arith.mulf %449, %447 : vector<8x16xf32>
    %451 = arith.addf %434, %450 : vector<8x16xf32>
    %c74 = arith.constant 74 : index
    %452 = memref.load %arg3[%c74] : memref<196xf32, #tpu.memory_space<smem>>
    %453 = vector.broadcast %452 : f32 to vector<8x16xf32>
    %454 = arith.mulf %453, %447 : vector<8x16xf32>
    %455 = arith.addf %438, %454 : vector<8x16xf32>
    %c123 = arith.constant 123 : index
    %456 = memref.load %arg3[%c123] : memref<196xf32, #tpu.memory_space<smem>>
    %457 = vector.broadcast %456 : f32 to vector<8x16xf32>
    %458 = arith.mulf %457, %447 : vector<8x16xf32>
    %459 = arith.addf %442, %458 : vector<8x16xf32>
    %c172 = arith.constant 172 : index
    %460 = memref.load %arg3[%c172] : memref<196xf32, #tpu.memory_space<smem>>
    %461 = vector.broadcast %460 : f32 to vector<8x16xf32>
    %462 = arith.mulf %461, %447 : vector<8x16xf32>
    %463 = arith.addf %446, %462 : vector<8x16xf32>
    %464 = vector.extract_strided_slice %378 {offsets = [0, 5], sizes = [8, 16], strides = [1, 1]} : vector<8x22xf32> to vector<8x16xf32>
    %c26 = arith.constant 26 : index
    %465 = memref.load %arg3[%c26] : memref<196xf32, #tpu.memory_space<smem>>
    %466 = vector.broadcast %465 : f32 to vector<8x16xf32>
    %467 = arith.mulf %466, %464 : vector<8x16xf32>
    %468 = arith.addf %451, %467 : vector<8x16xf32>
    %c75 = arith.constant 75 : index
    %469 = memref.load %arg3[%c75] : memref<196xf32, #tpu.memory_space<smem>>
    %470 = vector.broadcast %469 : f32 to vector<8x16xf32>
    %471 = arith.mulf %470, %464 : vector<8x16xf32>
    %472 = arith.addf %455, %471 : vector<8x16xf32>
    %c124 = arith.constant 124 : index
    %473 = memref.load %arg3[%c124] : memref<196xf32, #tpu.memory_space<smem>>
    %474 = vector.broadcast %473 : f32 to vector<8x16xf32>
    %475 = arith.mulf %474, %464 : vector<8x16xf32>
    %476 = arith.addf %459, %475 : vector<8x16xf32>
    %c173 = arith.constant 173 : index
    %477 = memref.load %arg3[%c173] : memref<196xf32, #tpu.memory_space<smem>>
    %478 = vector.broadcast %477 : f32 to vector<8x16xf32>
    %479 = arith.mulf %478, %464 : vector<8x16xf32>
    %480 = arith.addf %463, %479 : vector<8x16xf32>
    %481 = vector.extract_strided_slice %378 {offsets = [0, 6], sizes = [8, 16], strides = [1, 1]} : vector<8x22xf32> to vector<8x16xf32>
    %c27 = arith.constant 27 : index
    %482 = memref.load %arg3[%c27] : memref<196xf32, #tpu.memory_space<smem>>
    %483 = vector.broadcast %482 : f32 to vector<8x16xf32>
    %484 = arith.mulf %483, %481 : vector<8x16xf32>
    %485 = arith.addf %468, %484 : vector<8x16xf32>
    %c76 = arith.constant 76 : index
    %486 = memref.load %arg3[%c76] : memref<196xf32, #tpu.memory_space<smem>>
    %487 = vector.broadcast %486 : f32 to vector<8x16xf32>
    %488 = arith.mulf %487, %481 : vector<8x16xf32>
    %489 = arith.addf %472, %488 : vector<8x16xf32>
    %c125 = arith.constant 125 : index
    %490 = memref.load %arg3[%c125] : memref<196xf32, #tpu.memory_space<smem>>
    %491 = vector.broadcast %490 : f32 to vector<8x16xf32>
    %492 = arith.mulf %491, %481 : vector<8x16xf32>
    %493 = arith.addf %476, %492 : vector<8x16xf32>
    %c174 = arith.constant 174 : index
    %494 = memref.load %arg3[%c174] : memref<196xf32, #tpu.memory_space<smem>>
    %495 = vector.broadcast %494 : f32 to vector<8x16xf32>
    %496 = arith.mulf %495, %481 : vector<8x16xf32>
    %497 = arith.addf %480, %496 : vector<8x16xf32>
    %c4_i32 = arith.constant 4 : i32
    %498 = arith.addi %1, %c4_i32 : i32
    %c0_11 = arith.constant 0 : index
    %499 = arith.index_cast %498 : i32 to index
    %c0_12 = arith.constant 0 : index
    %500 = vector.load %arg2[%c0_11, %499, %c0_12] : memref<1x22x22xf32, #tpu.memory_space<vmem>>, vector<1x8x22xf32>
    %501 = vector.shape_cast %500 : vector<1x8x22xf32> to vector<8x22xf32>
    %502 = vector.extract_strided_slice %501 {offsets = [0, 0], sizes = [8, 16], strides = [1, 1]} : vector<8x22xf32> to vector<8x16xf32>
    %c28 = arith.constant 28 : index
    %503 = memref.load %arg3[%c28] : memref<196xf32, #tpu.memory_space<smem>>
    %504 = vector.broadcast %503 : f32 to vector<8x16xf32>
    %505 = arith.mulf %504, %502 : vector<8x16xf32>
    %506 = arith.addf %485, %505 : vector<8x16xf32>
    %c77 = arith.constant 77 : index
    %507 = memref.load %arg3[%c77] : memref<196xf32, #tpu.memory_space<smem>>
    %508 = vector.broadcast %507 : f32 to vector<8x16xf32>
    %509 = arith.mulf %508, %502 : vector<8x16xf32>
    %510 = arith.addf %489, %509 : vector<8x16xf32>
    %c126 = arith.constant 126 : index
    %511 = memref.load %arg3[%c126] : memref<196xf32, #tpu.memory_space<smem>>
    %512 = vector.broadcast %511 : f32 to vector<8x16xf32>
    %513 = arith.mulf %512, %502 : vector<8x16xf32>
    %514 = arith.addf %493, %513 : vector<8x16xf32>
    %c175 = arith.constant 175 : index
    %515 = memref.load %arg3[%c175] : memref<196xf32, #tpu.memory_space<smem>>
    %516 = vector.broadcast %515 : f32 to vector<8x16xf32>
    %517 = arith.mulf %516, %502 : vector<8x16xf32>
    %518 = arith.addf %497, %517 : vector<8x16xf32>
    %519 = vector.extract_strided_slice %501 {offsets = [0, 1], sizes = [8, 16], strides = [1, 1]} : vector<8x22xf32> to vector<8x16xf32>
    %c29 = arith.constant 29 : index
    %520 = memref.load %arg3[%c29] : memref<196xf32, #tpu.memory_space<smem>>
    %521 = vector.broadcast %520 : f32 to vector<8x16xf32>
    %522 = arith.mulf %521, %519 : vector<8x16xf32>
    %523 = arith.addf %506, %522 : vector<8x16xf32>
    %c78 = arith.constant 78 : index
    %524 = memref.load %arg3[%c78] : memref<196xf32, #tpu.memory_space<smem>>
    %525 = vector.broadcast %524 : f32 to vector<8x16xf32>
    %526 = arith.mulf %525, %519 : vector<8x16xf32>
    %527 = arith.addf %510, %526 : vector<8x16xf32>
    %c127 = arith.constant 127 : index
    %528 = memref.load %arg3[%c127] : memref<196xf32, #tpu.memory_space<smem>>
    %529 = vector.broadcast %528 : f32 to vector<8x16xf32>
    %530 = arith.mulf %529, %519 : vector<8x16xf32>
    %531 = arith.addf %514, %530 : vector<8x16xf32>
    %c176 = arith.constant 176 : index
    %532 = memref.load %arg3[%c176] : memref<196xf32, #tpu.memory_space<smem>>
    %533 = vector.broadcast %532 : f32 to vector<8x16xf32>
    %534 = arith.mulf %533, %519 : vector<8x16xf32>
    %535 = arith.addf %518, %534 : vector<8x16xf32>
    %536 = vector.extract_strided_slice %501 {offsets = [0, 2], sizes = [8, 16], strides = [1, 1]} : vector<8x22xf32> to vector<8x16xf32>
    %c30 = arith.constant 30 : index
    %537 = memref.load %arg3[%c30] : memref<196xf32, #tpu.memory_space<smem>>
    %538 = vector.broadcast %537 : f32 to vector<8x16xf32>
    %539 = arith.mulf %538, %536 : vector<8x16xf32>
    %540 = arith.addf %523, %539 : vector<8x16xf32>
    %c79 = arith.constant 79 : index
    %541 = memref.load %arg3[%c79] : memref<196xf32, #tpu.memory_space<smem>>
    %542 = vector.broadcast %541 : f32 to vector<8x16xf32>
    %543 = arith.mulf %542, %536 : vector<8x16xf32>
    %544 = arith.addf %527, %543 : vector<8x16xf32>
    %c128 = arith.constant 128 : index
    %545 = memref.load %arg3[%c128] : memref<196xf32, #tpu.memory_space<smem>>
    %546 = vector.broadcast %545 : f32 to vector<8x16xf32>
    %547 = arith.mulf %546, %536 : vector<8x16xf32>
    %548 = arith.addf %531, %547 : vector<8x16xf32>
    %c177 = arith.constant 177 : index
    %549 = memref.load %arg3[%c177] : memref<196xf32, #tpu.memory_space<smem>>
    %550 = vector.broadcast %549 : f32 to vector<8x16xf32>
    %551 = arith.mulf %550, %536 : vector<8x16xf32>
    %552 = arith.addf %535, %551 : vector<8x16xf32>
    %553 = vector.extract_strided_slice %501 {offsets = [0, 3], sizes = [8, 16], strides = [1, 1]} : vector<8x22xf32> to vector<8x16xf32>
    %c31 = arith.constant 31 : index
    %554 = memref.load %arg3[%c31] : memref<196xf32, #tpu.memory_space<smem>>
    %555 = vector.broadcast %554 : f32 to vector<8x16xf32>
    %556 = arith.mulf %555, %553 : vector<8x16xf32>
    %557 = arith.addf %540, %556 : vector<8x16xf32>
    %c80 = arith.constant 80 : index
    %558 = memref.load %arg3[%c80] : memref<196xf32, #tpu.memory_space<smem>>
    %559 = vector.broadcast %558 : f32 to vector<8x16xf32>
    %560 = arith.mulf %559, %553 : vector<8x16xf32>
    %561 = arith.addf %544, %560 : vector<8x16xf32>
    %c129 = arith.constant 129 : index
    %562 = memref.load %arg3[%c129] : memref<196xf32, #tpu.memory_space<smem>>
    %563 = vector.broadcast %562 : f32 to vector<8x16xf32>
    %564 = arith.mulf %563, %553 : vector<8x16xf32>
    %565 = arith.addf %548, %564 : vector<8x16xf32>
    %c178 = arith.constant 178 : index
    %566 = memref.load %arg3[%c178] : memref<196xf32, #tpu.memory_space<smem>>
    %567 = vector.broadcast %566 : f32 to vector<8x16xf32>
    %568 = arith.mulf %567, %553 : vector<8x16xf32>
    %569 = arith.addf %552, %568 : vector<8x16xf32>
    %570 = vector.extract_strided_slice %501 {offsets = [0, 4], sizes = [8, 16], strides = [1, 1]} : vector<8x22xf32> to vector<8x16xf32>
    %c32 = arith.constant 32 : index
    %571 = memref.load %arg3[%c32] : memref<196xf32, #tpu.memory_space<smem>>
    %572 = vector.broadcast %571 : f32 to vector<8x16xf32>
    %573 = arith.mulf %572, %570 : vector<8x16xf32>
    %574 = arith.addf %557, %573 : vector<8x16xf32>
    %c81 = arith.constant 81 : index
    %575 = memref.load %arg3[%c81] : memref<196xf32, #tpu.memory_space<smem>>
    %576 = vector.broadcast %575 : f32 to vector<8x16xf32>
    %577 = arith.mulf %576, %570 : vector<8x16xf32>
    %578 = arith.addf %561, %577 : vector<8x16xf32>
    %c130 = arith.constant 130 : index
    %579 = memref.load %arg3[%c130] : memref<196xf32, #tpu.memory_space<smem>>
    %580 = vector.broadcast %579 : f32 to vector<8x16xf32>
    %581 = arith.mulf %580, %570 : vector<8x16xf32>
    %582 = arith.addf %565, %581 : vector<8x16xf32>
    %c179 = arith.constant 179 : index
    %583 = memref.load %arg3[%c179] : memref<196xf32, #tpu.memory_space<smem>>
    %584 = vector.broadcast %583 : f32 to vector<8x16xf32>
    %585 = arith.mulf %584, %570 : vector<8x16xf32>
    %586 = arith.addf %569, %585 : vector<8x16xf32>
    %587 = vector.extract_strided_slice %501 {offsets = [0, 5], sizes = [8, 16], strides = [1, 1]} : vector<8x22xf32> to vector<8x16xf32>
    %c33 = arith.constant 33 : index
    %588 = memref.load %arg3[%c33] : memref<196xf32, #tpu.memory_space<smem>>
    %589 = vector.broadcast %588 : f32 to vector<8x16xf32>
    %590 = arith.mulf %589, %587 : vector<8x16xf32>
    %591 = arith.addf %574, %590 : vector<8x16xf32>
    %c82 = arith.constant 82 : index
    %592 = memref.load %arg3[%c82] : memref<196xf32, #tpu.memory_space<smem>>
    %593 = vector.broadcast %592 : f32 to vector<8x16xf32>
    %594 = arith.mulf %593, %587 : vector<8x16xf32>
    %595 = arith.addf %578, %594 : vector<8x16xf32>
    %c131 = arith.constant 131 : index
    %596 = memref.load %arg3[%c131] : memref<196xf32, #tpu.memory_space<smem>>
    %597 = vector.broadcast %596 : f32 to vector<8x16xf32>
    %598 = arith.mulf %597, %587 : vector<8x16xf32>
    %599 = arith.addf %582, %598 : vector<8x16xf32>
    %c180 = arith.constant 180 : index
    %600 = memref.load %arg3[%c180] : memref<196xf32, #tpu.memory_space<smem>>
    %601 = vector.broadcast %600 : f32 to vector<8x16xf32>
    %602 = arith.mulf %601, %587 : vector<8x16xf32>
    %603 = arith.addf %586, %602 : vector<8x16xf32>
    %604 = vector.extract_strided_slice %501 {offsets = [0, 6], sizes = [8, 16], strides = [1, 1]} : vector<8x22xf32> to vector<8x16xf32>
    %c34 = arith.constant 34 : index
    %605 = memref.load %arg3[%c34] : memref<196xf32, #tpu.memory_space<smem>>
    %606 = vector.broadcast %605 : f32 to vector<8x16xf32>
    %607 = arith.mulf %606, %604 : vector<8x16xf32>
    %608 = arith.addf %591, %607 : vector<8x16xf32>
    %c83 = arith.constant 83 : index
    %609 = memref.load %arg3[%c83] : memref<196xf32, #tpu.memory_space<smem>>
    %610 = vector.broadcast %609 : f32 to vector<8x16xf32>
    %611 = arith.mulf %610, %604 : vector<8x16xf32>
    %612 = arith.addf %595, %611 : vector<8x16xf32>
    %c132 = arith.constant 132 : index
    %613 = memref.load %arg3[%c132] : memref<196xf32, #tpu.memory_space<smem>>
    %614 = vector.broadcast %613 : f32 to vector<8x16xf32>
    %615 = arith.mulf %614, %604 : vector<8x16xf32>
    %616 = arith.addf %599, %615 : vector<8x16xf32>
    %c181 = arith.constant 181 : index
    %617 = memref.load %arg3[%c181] : memref<196xf32, #tpu.memory_space<smem>>
    %618 = vector.broadcast %617 : f32 to vector<8x16xf32>
    %619 = arith.mulf %618, %604 : vector<8x16xf32>
    %620 = arith.addf %603, %619 : vector<8x16xf32>
    %c5_i32 = arith.constant 5 : i32
    %621 = arith.addi %1, %c5_i32 : i32
    %c0_13 = arith.constant 0 : index
    %622 = arith.index_cast %621 : i32 to index
    %c0_14 = arith.constant 0 : index
    %623 = vector.load %arg2[%c0_13, %622, %c0_14] : memref<1x22x22xf32, #tpu.memory_space<vmem>>, vector<1x8x22xf32>
    %624 = vector.shape_cast %623 : vector<1x8x22xf32> to vector<8x22xf32>
    %625 = vector.extract_strided_slice %624 {offsets = [0, 0], sizes = [8, 16], strides = [1, 1]} : vector<8x22xf32> to vector<8x16xf32>
    %c35 = arith.constant 35 : index
    %626 = memref.load %arg3[%c35] : memref<196xf32, #tpu.memory_space<smem>>
    %627 = vector.broadcast %626 : f32 to vector<8x16xf32>
    %628 = arith.mulf %627, %625 : vector<8x16xf32>
    %629 = arith.addf %608, %628 : vector<8x16xf32>
    %c84 = arith.constant 84 : index
    %630 = memref.load %arg3[%c84] : memref<196xf32, #tpu.memory_space<smem>>
    %631 = vector.broadcast %630 : f32 to vector<8x16xf32>
    %632 = arith.mulf %631, %625 : vector<8x16xf32>
    %633 = arith.addf %612, %632 : vector<8x16xf32>
    %c133 = arith.constant 133 : index
    %634 = memref.load %arg3[%c133] : memref<196xf32, #tpu.memory_space<smem>>
    %635 = vector.broadcast %634 : f32 to vector<8x16xf32>
    %636 = arith.mulf %635, %625 : vector<8x16xf32>
    %637 = arith.addf %616, %636 : vector<8x16xf32>
    %c182 = arith.constant 182 : index
    %638 = memref.load %arg3[%c182] : memref<196xf32, #tpu.memory_space<smem>>
    %639 = vector.broadcast %638 : f32 to vector<8x16xf32>
    %640 = arith.mulf %639, %625 : vector<8x16xf32>
    %641 = arith.addf %620, %640 : vector<8x16xf32>
    %642 = vector.extract_strided_slice %624 {offsets = [0, 1], sizes = [8, 16], strides = [1, 1]} : vector<8x22xf32> to vector<8x16xf32>
    %c36 = arith.constant 36 : index
    %643 = memref.load %arg3[%c36] : memref<196xf32, #tpu.memory_space<smem>>
    %644 = vector.broadcast %643 : f32 to vector<8x16xf32>
    %645 = arith.mulf %644, %642 : vector<8x16xf32>
    %646 = arith.addf %629, %645 : vector<8x16xf32>
    %c85 = arith.constant 85 : index
    %647 = memref.load %arg3[%c85] : memref<196xf32, #tpu.memory_space<smem>>
    %648 = vector.broadcast %647 : f32 to vector<8x16xf32>
    %649 = arith.mulf %648, %642 : vector<8x16xf32>
    %650 = arith.addf %633, %649 : vector<8x16xf32>
    %c134 = arith.constant 134 : index
    %651 = memref.load %arg3[%c134] : memref<196xf32, #tpu.memory_space<smem>>
    %652 = vector.broadcast %651 : f32 to vector<8x16xf32>
    %653 = arith.mulf %652, %642 : vector<8x16xf32>
    %654 = arith.addf %637, %653 : vector<8x16xf32>
    %c183 = arith.constant 183 : index
    %655 = memref.load %arg3[%c183] : memref<196xf32, #tpu.memory_space<smem>>
    %656 = vector.broadcast %655 : f32 to vector<8x16xf32>
    %657 = arith.mulf %656, %642 : vector<8x16xf32>
    %658 = arith.addf %641, %657 : vector<8x16xf32>
    %659 = vector.extract_strided_slice %624 {offsets = [0, 2], sizes = [8, 16], strides = [1, 1]} : vector<8x22xf32> to vector<8x16xf32>
    %c37 = arith.constant 37 : index
    %660 = memref.load %arg3[%c37] : memref<196xf32, #tpu.memory_space<smem>>
    %661 = vector.broadcast %660 : f32 to vector<8x16xf32>
    %662 = arith.mulf %661, %659 : vector<8x16xf32>
    %663 = arith.addf %646, %662 : vector<8x16xf32>
    %c86 = arith.constant 86 : index
    %664 = memref.load %arg3[%c86] : memref<196xf32, #tpu.memory_space<smem>>
    %665 = vector.broadcast %664 : f32 to vector<8x16xf32>
    %666 = arith.mulf %665, %659 : vector<8x16xf32>
    %667 = arith.addf %650, %666 : vector<8x16xf32>
    %c135 = arith.constant 135 : index
    %668 = memref.load %arg3[%c135] : memref<196xf32, #tpu.memory_space<smem>>
    %669 = vector.broadcast %668 : f32 to vector<8x16xf32>
    %670 = arith.mulf %669, %659 : vector<8x16xf32>
    %671 = arith.addf %654, %670 : vector<8x16xf32>
    %c184 = arith.constant 184 : index
    %672 = memref.load %arg3[%c184] : memref<196xf32, #tpu.memory_space<smem>>
    %673 = vector.broadcast %672 : f32 to vector<8x16xf32>
    %674 = arith.mulf %673, %659 : vector<8x16xf32>
    %675 = arith.addf %658, %674 : vector<8x16xf32>
    %676 = vector.extract_strided_slice %624 {offsets = [0, 3], sizes = [8, 16], strides = [1, 1]} : vector<8x22xf32> to vector<8x16xf32>
    %c38 = arith.constant 38 : index
    %677 = memref.load %arg3[%c38] : memref<196xf32, #tpu.memory_space<smem>>
    %678 = vector.broadcast %677 : f32 to vector<8x16xf32>
    %679 = arith.mulf %678, %676 : vector<8x16xf32>
    %680 = arith.addf %663, %679 : vector<8x16xf32>
    %c87 = arith.constant 87 : index
    %681 = memref.load %arg3[%c87] : memref<196xf32, #tpu.memory_space<smem>>
    %682 = vector.broadcast %681 : f32 to vector<8x16xf32>
    %683 = arith.mulf %682, %676 : vector<8x16xf32>
    %684 = arith.addf %667, %683 : vector<8x16xf32>
    %c136 = arith.constant 136 : index
    %685 = memref.load %arg3[%c136] : memref<196xf32, #tpu.memory_space<smem>>
    %686 = vector.broadcast %685 : f32 to vector<8x16xf32>
    %687 = arith.mulf %686, %676 : vector<8x16xf32>
    %688 = arith.addf %671, %687 : vector<8x16xf32>
    %c185 = arith.constant 185 : index
    %689 = memref.load %arg3[%c185] : memref<196xf32, #tpu.memory_space<smem>>
    %690 = vector.broadcast %689 : f32 to vector<8x16xf32>
    %691 = arith.mulf %690, %676 : vector<8x16xf32>
    %692 = arith.addf %675, %691 : vector<8x16xf32>
    %693 = vector.extract_strided_slice %624 {offsets = [0, 4], sizes = [8, 16], strides = [1, 1]} : vector<8x22xf32> to vector<8x16xf32>
    %c39 = arith.constant 39 : index
    %694 = memref.load %arg3[%c39] : memref<196xf32, #tpu.memory_space<smem>>
    %695 = vector.broadcast %694 : f32 to vector<8x16xf32>
    %696 = arith.mulf %695, %693 : vector<8x16xf32>
    %697 = arith.addf %680, %696 : vector<8x16xf32>
    %c88 = arith.constant 88 : index
    %698 = memref.load %arg3[%c88] : memref<196xf32, #tpu.memory_space<smem>>
    %699 = vector.broadcast %698 : f32 to vector<8x16xf32>
    %700 = arith.mulf %699, %693 : vector<8x16xf32>
    %701 = arith.addf %684, %700 : vector<8x16xf32>
    %c137 = arith.constant 137 : index
    %702 = memref.load %arg3[%c137] : memref<196xf32, #tpu.memory_space<smem>>
    %703 = vector.broadcast %702 : f32 to vector<8x16xf32>
    %704 = arith.mulf %703, %693 : vector<8x16xf32>
    %705 = arith.addf %688, %704 : vector<8x16xf32>
    %c186 = arith.constant 186 : index
    %706 = memref.load %arg3[%c186] : memref<196xf32, #tpu.memory_space<smem>>
    %707 = vector.broadcast %706 : f32 to vector<8x16xf32>
    %708 = arith.mulf %707, %693 : vector<8x16xf32>
    %709 = arith.addf %692, %708 : vector<8x16xf32>
    %710 = vector.extract_strided_slice %624 {offsets = [0, 5], sizes = [8, 16], strides = [1, 1]} : vector<8x22xf32> to vector<8x16xf32>
    %c40 = arith.constant 40 : index
    %711 = memref.load %arg3[%c40] : memref<196xf32, #tpu.memory_space<smem>>
    %712 = vector.broadcast %711 : f32 to vector<8x16xf32>
    %713 = arith.mulf %712, %710 : vector<8x16xf32>
    %714 = arith.addf %697, %713 : vector<8x16xf32>
    %c89 = arith.constant 89 : index
    %715 = memref.load %arg3[%c89] : memref<196xf32, #tpu.memory_space<smem>>
    %716 = vector.broadcast %715 : f32 to vector<8x16xf32>
    %717 = arith.mulf %716, %710 : vector<8x16xf32>
    %718 = arith.addf %701, %717 : vector<8x16xf32>
    %c138 = arith.constant 138 : index
    %719 = memref.load %arg3[%c138] : memref<196xf32, #tpu.memory_space<smem>>
    %720 = vector.broadcast %719 : f32 to vector<8x16xf32>
    %721 = arith.mulf %720, %710 : vector<8x16xf32>
    %722 = arith.addf %705, %721 : vector<8x16xf32>
    %c187 = arith.constant 187 : index
    %723 = memref.load %arg3[%c187] : memref<196xf32, #tpu.memory_space<smem>>
    %724 = vector.broadcast %723 : f32 to vector<8x16xf32>
    %725 = arith.mulf %724, %710 : vector<8x16xf32>
    %726 = arith.addf %709, %725 : vector<8x16xf32>
    %727 = vector.extract_strided_slice %624 {offsets = [0, 6], sizes = [8, 16], strides = [1, 1]} : vector<8x22xf32> to vector<8x16xf32>
    %c41 = arith.constant 41 : index
    %728 = memref.load %arg3[%c41] : memref<196xf32, #tpu.memory_space<smem>>
    %729 = vector.broadcast %728 : f32 to vector<8x16xf32>
    %730 = arith.mulf %729, %727 : vector<8x16xf32>
    %731 = arith.addf %714, %730 : vector<8x16xf32>
    %c90 = arith.constant 90 : index
    %732 = memref.load %arg3[%c90] : memref<196xf32, #tpu.memory_space<smem>>
    %733 = vector.broadcast %732 : f32 to vector<8x16xf32>
    %734 = arith.mulf %733, %727 : vector<8x16xf32>
    %735 = arith.addf %718, %734 : vector<8x16xf32>
    %c139 = arith.constant 139 : index
    %736 = memref.load %arg3[%c139] : memref<196xf32, #tpu.memory_space<smem>>
    %737 = vector.broadcast %736 : f32 to vector<8x16xf32>
    %738 = arith.mulf %737, %727 : vector<8x16xf32>
    %739 = arith.addf %722, %738 : vector<8x16xf32>
    %c188 = arith.constant 188 : index
    %740 = memref.load %arg3[%c188] : memref<196xf32, #tpu.memory_space<smem>>
    %741 = vector.broadcast %740 : f32 to vector<8x16xf32>
    %742 = arith.mulf %741, %727 : vector<8x16xf32>
    %743 = arith.addf %726, %742 : vector<8x16xf32>
    %c6_i32 = arith.constant 6 : i32
    %744 = arith.addi %1, %c6_i32 : i32
    %c0_15 = arith.constant 0 : index
    %745 = arith.index_cast %744 : i32 to index
    %c0_16 = arith.constant 0 : index
    %746 = vector.load %arg2[%c0_15, %745, %c0_16] : memref<1x22x22xf32, #tpu.memory_space<vmem>>, vector<1x8x22xf32>
    %747 = vector.shape_cast %746 : vector<1x8x22xf32> to vector<8x22xf32>
    %748 = vector.extract_strided_slice %747 {offsets = [0, 0], sizes = [8, 16], strides = [1, 1]} : vector<8x22xf32> to vector<8x16xf32>
    %c42 = arith.constant 42 : index
    %749 = memref.load %arg3[%c42] : memref<196xf32, #tpu.memory_space<smem>>
    %750 = vector.broadcast %749 : f32 to vector<8x16xf32>
    %751 = arith.mulf %750, %748 : vector<8x16xf32>
    %752 = arith.addf %731, %751 : vector<8x16xf32>
    %c91 = arith.constant 91 : index
    %753 = memref.load %arg3[%c91] : memref<196xf32, #tpu.memory_space<smem>>
    %754 = vector.broadcast %753 : f32 to vector<8x16xf32>
    %755 = arith.mulf %754, %748 : vector<8x16xf32>
    %756 = arith.addf %735, %755 : vector<8x16xf32>
    %c140 = arith.constant 140 : index
    %757 = memref.load %arg3[%c140] : memref<196xf32, #tpu.memory_space<smem>>
    %758 = vector.broadcast %757 : f32 to vector<8x16xf32>
    %759 = arith.mulf %758, %748 : vector<8x16xf32>
    %760 = arith.addf %739, %759 : vector<8x16xf32>
    %c189 = arith.constant 189 : index
    %761 = memref.load %arg3[%c189] : memref<196xf32, #tpu.memory_space<smem>>
    %762 = vector.broadcast %761 : f32 to vector<8x16xf32>
    %763 = arith.mulf %762, %748 : vector<8x16xf32>
    %764 = arith.addf %743, %763 : vector<8x16xf32>
    %765 = vector.extract_strided_slice %747 {offsets = [0, 1], sizes = [8, 16], strides = [1, 1]} : vector<8x22xf32> to vector<8x16xf32>
    %c43 = arith.constant 43 : index
    %766 = memref.load %arg3[%c43] : memref<196xf32, #tpu.memory_space<smem>>
    %767 = vector.broadcast %766 : f32 to vector<8x16xf32>
    %768 = arith.mulf %767, %765 : vector<8x16xf32>
    %769 = arith.addf %752, %768 : vector<8x16xf32>
    %c92 = arith.constant 92 : index
    %770 = memref.load %arg3[%c92] : memref<196xf32, #tpu.memory_space<smem>>
    %771 = vector.broadcast %770 : f32 to vector<8x16xf32>
    %772 = arith.mulf %771, %765 : vector<8x16xf32>
    %773 = arith.addf %756, %772 : vector<8x16xf32>
    %c141 = arith.constant 141 : index
    %774 = memref.load %arg3[%c141] : memref<196xf32, #tpu.memory_space<smem>>
    %775 = vector.broadcast %774 : f32 to vector<8x16xf32>
    %776 = arith.mulf %775, %765 : vector<8x16xf32>
    %777 = arith.addf %760, %776 : vector<8x16xf32>
    %c190 = arith.constant 190 : index
    %778 = memref.load %arg3[%c190] : memref<196xf32, #tpu.memory_space<smem>>
    %779 = vector.broadcast %778 : f32 to vector<8x16xf32>
    %780 = arith.mulf %779, %765 : vector<8x16xf32>
    %781 = arith.addf %764, %780 : vector<8x16xf32>
    %782 = vector.extract_strided_slice %747 {offsets = [0, 2], sizes = [8, 16], strides = [1, 1]} : vector<8x22xf32> to vector<8x16xf32>
    %c44 = arith.constant 44 : index
    %783 = memref.load %arg3[%c44] : memref<196xf32, #tpu.memory_space<smem>>
    %784 = vector.broadcast %783 : f32 to vector<8x16xf32>
    %785 = arith.mulf %784, %782 : vector<8x16xf32>
    %786 = arith.addf %769, %785 : vector<8x16xf32>
    %c93 = arith.constant 93 : index
    %787 = memref.load %arg3[%c93] : memref<196xf32, #tpu.memory_space<smem>>
    %788 = vector.broadcast %787 : f32 to vector<8x16xf32>
    %789 = arith.mulf %788, %782 : vector<8x16xf32>
    %790 = arith.addf %773, %789 : vector<8x16xf32>
    %c142 = arith.constant 142 : index
    %791 = memref.load %arg3[%c142] : memref<196xf32, #tpu.memory_space<smem>>
    %792 = vector.broadcast %791 : f32 to vector<8x16xf32>
    %793 = arith.mulf %792, %782 : vector<8x16xf32>
    %794 = arith.addf %777, %793 : vector<8x16xf32>
    %c191 = arith.constant 191 : index
    %795 = memref.load %arg3[%c191] : memref<196xf32, #tpu.memory_space<smem>>
    %796 = vector.broadcast %795 : f32 to vector<8x16xf32>
    %797 = arith.mulf %796, %782 : vector<8x16xf32>
    %798 = arith.addf %781, %797 : vector<8x16xf32>
    %799 = vector.extract_strided_slice %747 {offsets = [0, 3], sizes = [8, 16], strides = [1, 1]} : vector<8x22xf32> to vector<8x16xf32>
    %c45 = arith.constant 45 : index
    %800 = memref.load %arg3[%c45] : memref<196xf32, #tpu.memory_space<smem>>
    %801 = vector.broadcast %800 : f32 to vector<8x16xf32>
    %802 = arith.mulf %801, %799 : vector<8x16xf32>
    %803 = arith.addf %786, %802 : vector<8x16xf32>
    %c94 = arith.constant 94 : index
    %804 = memref.load %arg3[%c94] : memref<196xf32, #tpu.memory_space<smem>>
    %805 = vector.broadcast %804 : f32 to vector<8x16xf32>
    %806 = arith.mulf %805, %799 : vector<8x16xf32>
    %807 = arith.addf %790, %806 : vector<8x16xf32>
    %c143 = arith.constant 143 : index
    %808 = memref.load %arg3[%c143] : memref<196xf32, #tpu.memory_space<smem>>
    %809 = vector.broadcast %808 : f32 to vector<8x16xf32>
    %810 = arith.mulf %809, %799 : vector<8x16xf32>
    %811 = arith.addf %794, %810 : vector<8x16xf32>
    %c192 = arith.constant 192 : index
    %812 = memref.load %arg3[%c192] : memref<196xf32, #tpu.memory_space<smem>>
    %813 = vector.broadcast %812 : f32 to vector<8x16xf32>
    %814 = arith.mulf %813, %799 : vector<8x16xf32>
    %815 = arith.addf %798, %814 : vector<8x16xf32>
    %816 = vector.extract_strided_slice %747 {offsets = [0, 4], sizes = [8, 16], strides = [1, 1]} : vector<8x22xf32> to vector<8x16xf32>
    %c46 = arith.constant 46 : index
    %817 = memref.load %arg3[%c46] : memref<196xf32, #tpu.memory_space<smem>>
    %818 = vector.broadcast %817 : f32 to vector<8x16xf32>
    %819 = arith.mulf %818, %816 : vector<8x16xf32>
    %820 = arith.addf %803, %819 : vector<8x16xf32>
    %c95 = arith.constant 95 : index
    %821 = memref.load %arg3[%c95] : memref<196xf32, #tpu.memory_space<smem>>
    %822 = vector.broadcast %821 : f32 to vector<8x16xf32>
    %823 = arith.mulf %822, %816 : vector<8x16xf32>
    %824 = arith.addf %807, %823 : vector<8x16xf32>
    %c144 = arith.constant 144 : index
    %825 = memref.load %arg3[%c144] : memref<196xf32, #tpu.memory_space<smem>>
    %826 = vector.broadcast %825 : f32 to vector<8x16xf32>
    %827 = arith.mulf %826, %816 : vector<8x16xf32>
    %828 = arith.addf %811, %827 : vector<8x16xf32>
    %c193 = arith.constant 193 : index
    %829 = memref.load %arg3[%c193] : memref<196xf32, #tpu.memory_space<smem>>
    %830 = vector.broadcast %829 : f32 to vector<8x16xf32>
    %831 = arith.mulf %830, %816 : vector<8x16xf32>
    %832 = arith.addf %815, %831 : vector<8x16xf32>
    %833 = vector.extract_strided_slice %747 {offsets = [0, 5], sizes = [8, 16], strides = [1, 1]} : vector<8x22xf32> to vector<8x16xf32>
    %c47 = arith.constant 47 : index
    %834 = memref.load %arg3[%c47] : memref<196xf32, #tpu.memory_space<smem>>
    %835 = vector.broadcast %834 : f32 to vector<8x16xf32>
    %836 = arith.mulf %835, %833 : vector<8x16xf32>
    %837 = arith.addf %820, %836 : vector<8x16xf32>
    %c96 = arith.constant 96 : index
    %838 = memref.load %arg3[%c96] : memref<196xf32, #tpu.memory_space<smem>>
    %839 = vector.broadcast %838 : f32 to vector<8x16xf32>
    %840 = arith.mulf %839, %833 : vector<8x16xf32>
    %841 = arith.addf %824, %840 : vector<8x16xf32>
    %c145 = arith.constant 145 : index
    %842 = memref.load %arg3[%c145] : memref<196xf32, #tpu.memory_space<smem>>
    %843 = vector.broadcast %842 : f32 to vector<8x16xf32>
    %844 = arith.mulf %843, %833 : vector<8x16xf32>
    %845 = arith.addf %828, %844 : vector<8x16xf32>
    %c194 = arith.constant 194 : index
    %846 = memref.load %arg3[%c194] : memref<196xf32, #tpu.memory_space<smem>>
    %847 = vector.broadcast %846 : f32 to vector<8x16xf32>
    %848 = arith.mulf %847, %833 : vector<8x16xf32>
    %849 = arith.addf %832, %848 : vector<8x16xf32>
    %850 = vector.extract_strided_slice %747 {offsets = [0, 6], sizes = [8, 16], strides = [1, 1]} : vector<8x22xf32> to vector<8x16xf32>
    %c48 = arith.constant 48 : index
    %851 = memref.load %arg3[%c48] : memref<196xf32, #tpu.memory_space<smem>>
    %852 = vector.broadcast %851 : f32 to vector<8x16xf32>
    %853 = arith.mulf %852, %850 : vector<8x16xf32>
    %854 = arith.addf %837, %853 : vector<8x16xf32>
    %c97 = arith.constant 97 : index
    %855 = memref.load %arg3[%c97] : memref<196xf32, #tpu.memory_space<smem>>
    %856 = vector.broadcast %855 : f32 to vector<8x16xf32>
    %857 = arith.mulf %856, %850 : vector<8x16xf32>
    %858 = arith.addf %841, %857 : vector<8x16xf32>
    %c146 = arith.constant 146 : index
    %859 = memref.load %arg3[%c146] : memref<196xf32, #tpu.memory_space<smem>>
    %860 = vector.broadcast %859 : f32 to vector<8x16xf32>
    %861 = arith.mulf %860, %850 : vector<8x16xf32>
    %862 = arith.addf %845, %861 : vector<8x16xf32>
    %c195 = arith.constant 195 : index
    %863 = memref.load %arg3[%c195] : memref<196xf32, #tpu.memory_space<smem>>
    %864 = vector.broadcast %863 : f32 to vector<8x16xf32>
    %865 = arith.mulf %864, %850 : vector<8x16xf32>
    %866 = arith.addf %849, %865 : vector<8x16xf32>
    %c0_17 = arith.constant 0 : index
    %c0_18 = arith.constant 0 : index
    %c0_19 = arith.constant 0 : index
    %c0_20 = arith.constant 0 : index
    %867 = vector.load %arg4[%c0_17, %c0_18, %c0_19, %c0_20] : memref<1x4x8x16xf32, #tpu.memory_space<vmem>>, vector<1x1x8x16xf32>
    %868 = vector.shape_cast %867 : vector<1x1x8x16xf32> to vector<8x16xf32>
    %869 = vector.shape_cast %854 : vector<8x16xf32> to vector<1x1x8x16xf32>
    tpu.vector_store %arg4[%c0_17, %c0_18, %c0_19, %c0_20], %869 {strides = array<i32>} : memref<1x4x8x16xf32, #tpu.memory_space<vmem>>, vector<1x1x8x16xf32>,
    %c0_21 = arith.constant 0 : index
    %c1_22 = arith.constant 1 : index
    %c0_23 = arith.constant 0 : index
    %c0_24 = arith.constant 0 : index
    %870 = vector.load %arg4[%c0_21, %c1_22, %c0_23, %c0_24] : memref<1x4x8x16xf32, #tpu.memory_space<vmem>>, vector<1x1x8x16xf32>
    %871 = vector.shape_cast %870 : vector<1x1x8x16xf32> to vector<8x16xf32>
    %872 = vector.shape_cast %858 : vector<8x16xf32> to vector<1x1x8x16xf32>
    tpu.vector_store %arg4[%c0_21, %c1_22, %c0_23, %c0_24], %872 {strides = array<i32>} : memref<1x4x8x16xf32, #tpu.memory_space<vmem>>, vector<1x1x8x16xf32>,
    %c0_25 = arith.constant 0 : index
    %c2_26 = arith.constant 2 : index
    %c0_27 = arith.constant 0 : index
    %c0_28 = arith.constant 0 : index
    %873 = vector.load %arg4[%c0_25, %c2_26, %c0_27, %c0_28] : memref<1x4x8x16xf32, #tpu.memory_space<vmem>>, vector<1x1x8x16xf32>
    %874 = vector.shape_cast %873 : vector<1x1x8x16xf32> to vector<8x16xf32>
    %875 = vector.shape_cast %862 : vector<8x16xf32> to vector<1x1x8x16xf32>
    tpu.vector_store %arg4[%c0_25, %c2_26, %c0_27, %c0_28], %875 {strides = array<i32>} : memref<1x4x8x16xf32, #tpu.memory_space<vmem>>, vector<1x1x8x16xf32>,
    %c0_29 = arith.constant 0 : index
    %c3_30 = arith.constant 3 : index
    %c0_31 = arith.constant 0 : index
    %c0_32 = arith.constant 0 : index
    %876 = vector.load %arg4[%c0_29, %c3_30, %c0_31, %c0_32] : memref<1x4x8x16xf32, #tpu.memory_space<vmem>>, vector<1x1x8x16xf32>
    %877 = vector.shape_cast %876 : vector<1x1x8x16xf32> to vector<8x16xf32>
    %878 = vector.shape_cast %866 : vector<8x16xf32> to vector<1x1x8x16xf32>
    tpu.vector_store %arg4[%c0_29, %c3_30, %c0_31, %c0_32], %878 {strides = array<i32>} : memref<1x4x8x16xf32, #tpu.memory_space<vmem>>, vector<1x1x8x16xf32>,
    return
  }
  func.func @transform_0(%arg0: i32, %arg1: i32) -> (i32, i32, i32) {
    %c0_i32 = arith.constant 0 : i32
    %c0_i32_0 = arith.constant 0 : i32
    %c0_i32_1 = arith.constant 0 : i32
    return %arg0, %c0_i32, %c0_i32_0 : i32, i32, i32
  }
  func.func @transform_1(%arg0: i32, %arg1: i32) -> i32 {
    %c0_i32 = arith.constant 0 : i32
    %c0_i32_0 = arith.constant 0 : i32
    return %c0_i32 : i32
  }
  func.func @transform_2(%arg0: i32, %arg1: i32) -> (i32, i32, i32, i32) {
    %c0_i32 = arith.constant 0 : i32
    %c0_i32_0 = arith.constant 0 : i32
    %c0_i32_1 = arith.constant 0 : i32
    return %arg0, %c0_i32, %arg1, %c0_i32_0 : i32, i32, i32, i32
  }
}

</mosaic_0001>

<llo_original>
// kernel: tpu_custom_call.1
$region0: #{tpu_custom_call.1}
  #allocation0 [shape = 'u32[]', space=smem, size = 0x4, offset = 0x4, fixed_abs, tag = 'smem constant byte address 0x4 - core index']
  #allocation1 [shape = 'u32[144,128]{1,0:T(1,128)}', space=vmem, size = 0x12000, scoped, tag = 'internal scratch']
  %s0 = inlined_call_operand.vmem [shape: f32[2,22,22], index: 0, kind: input, shape index: {}]
  %s1 = inlined_call_operand.vmem [shape: f32[196], index: 1, kind: input, shape index: {}]
  %s2 = inlined_call_operand.hbm [shape: f32[2,4,16,16], index: 2, kind: output, shape index: {}]
  %s3 = sld [smem:[#allocation0]]
  $region45: #{tpu_custom_call.1} parent=0
    _
  %s5 = ssub.s32 1, %s3
  %s6 = scalar_select 0, %s5, %s3
  $region1: #{tpu_custom_call.1} parent=0
    #allocation2 [shape = 'u8[1024]{0}', space=smem, size = 0x400, scoped, tag = 'input window, operand 1, single buffered']
    #allocation3 [shape = 's32[2]{0}', space=sflag, size = 0x8, scoped, tag = 'scoped memory for tpu_custom_call.1']
    #allocation4 [shape = 's32[2]{0}', space=sflag, size = 0x8, scoped, tag = 'scoped memory for tpu_custom_call.1']
    #allocation5 [shape = 'u8[32768]{0}', space=vmem, size = 0x8000, scoped, tag = 'output window, operand 0']
    %7 = vsyncpa [#allocation4], 0
    %8 = vsyncpa [#allocation3], 0
    %s9 = scalar_lea.sflag [#allocation3], 1
    %10 = vsyncpa %s9, 0
    loop: start=0, step=1, limit=6
    $region2: #{tpu_custom_call.1} parent=1 // loop_pre_header
      _
    $region3: #{tpu_custom_call.1} parent=1 // loop_header
      %s12 = sphi 0, %s16
      %p13 = scmp.ge.s32.totalorder %s12, 6
      %s19 = sphi 0, %s31
      %s20 = sphi 0, %s27
      %s21 = sphi 0, %s19
      %s22 = sphi 0, %s20
      %s23 = sphi 0, %s21
      %s24 = sphi 0, %s22
      %s34 = sphi 0, %s36
      %s37 = sphi 0, %s34
      %s38 = sphi 0, %s37
      %s54 = sphi 0, %s38
      %s58 = sphi 0, %s58
      %s60 = sphi 0, %s58
      %s61 = sphi 0, %s60
      %s75 = sphi 0, %s61
      %s83 = sphi 0, %s85
      %s86 = sphi 0, %s83
      %s87 = sphi 0, %s86
      %s103 = sphi 0, %s87
    $region4: #{tpu_custom_call.1} parent=1 // loop_header_branch
      %15 = sbr.rel (%p13) target = $region8
    $region5: #{tpu_custom_call.1} parent=1 // loop_body
      %s17 = ssub.s32 %s12, 1
      %s18 = ssub.s32 %s12, 2
      %s25 = sadd.s32 1, %s20
      %p26 = scmp.ge.s32.totalorder %s25, 2
      %s27 = scalar_select %p26, 0, %s25
      %s28 = sadd.s32 1, %s19
      %s29 = scalar_select %p26, %s28, %s19
      %p30 = scmp.ge.s32.totalorder %s29, 2
      %s31 = scalar_select %p30, 0, %s29
      %s32 = ssub.s32 %s19, %s31
      %p33 = scmp.eq.s32.totalorder %s32, 0
      %s35 = sadd.s32 %s34, 1
      %s36 = scalar_select %p33, %s34, %s35
      %p39 = pneg %p33
      %p40 = scmp.eq.s32.totalorder %s12, 3
      %p41 = por %p39, %p40
      %p42 = scmp.ne.s32.totalorder %s34, %s37
      %p43 = scmp.eq.s32.totalorder %s12, 0
      %p44 = por %p42, %p43
      %p45 = scmp.ne.s32.totalorder %s34, %s37
      %p46 = scmp.eq.s32.totalorder %s17, 3
      %p47 = por %p45, %p46
      %p48 = scmp.ne.s32.totalorder %s37, %s38
      %p49 = scmp.eq.s32.totalorder %s17, 0
      %p50 = por %p48, %p49
      %p51 = scmp.ne.s32.totalorder %s37, %s38
      %p52 = scmp.eq.s32.totalorder %s18, 3
      %p53 = por %p51, %p52
      %p55 = scmp.ne.s32.totalorder %s38, %s54
      %p56 = scmp.eq.s32.totalorder %s18, 0
      %p57 = por %p55, %p56
      %s59 = sadd.s32 %s58, 1
      %p62 = scmp.eq.s32.totalorder %s12, 3
      %p63 = scmp.ne.s32.totalorder %s58, %s60
      %p64 = scmp.eq.s32.totalorder %s12, 0
      %p65 = por %p63, %p64
      %p66 = scmp.ne.s32.totalorder %s58, %s60
      %p67 = scmp.eq.s32.totalorder %s17, 3
      %p68 = por %p66, %p67
      %p69 = scmp.ne.s32.totalorder %s60, %s61
      %p70 = scmp.eq.s32.totalorder %s17, 0
      %p71 = por %p69, %p70
      %p72 = scmp.ne.s32.totalorder %s60, %s61
      %p73 = scmp.eq.s32.totalorder %s18, 3
      %p74 = por %p72, %p73
      %p76 = scmp.ne.s32.totalorder %s61, %s75
      %p77 = scmp.eq.s32.totalorder %s18, 0
      %p78 = por %p76, %p77
      %s79 = ssub.s32 %s19, %s31
      %s80 = ssub.s32 %s20, %s27
      %s81 = sor.u32 %s79, %s80
      %p82 = scmp.eq.s32.totalorder %s81, 0
      %s84 = sadd.s32 %s83, 1
      %s85 = scalar_select %p82, %s83, %s84
      %p88 = pneg %p82
      %p89 = scmp.eq.s32.totalorder %s12, 3
      %p90 = por %p88, %p89
      %p91 = scmp.ne.s32.totalorder %s83, %s86
      %p92 = scmp.eq.s32.totalorder %s12, 0
      %p93 = por %p91, %p92
      %p94 = scmp.ne.s32.totalorder %s83, %s86
      %p95 = scmp.eq.s32.totalorder %s17, 3
      %p96 = por %p94, %p95
      %p97 = scmp.ne.s32.totalorder %s86, %s87
      %p98 = scmp.eq.s32.totalorder %s17, 0
      %p99 = por %p97, %p98
      %p100 = scmp.ne.s32.totalorder %s86, %s87
      %p101 = scmp.eq.s32.totalorder %s18, 3
      %p102 = por %p100, %p101
      %p104 = scmp.ne.s32.totalorder %s87, %s103
      %p105 = scmp.eq.s32.totalorder %s18, 0
      %p106 = por %p104, %p105
      %p107 = scmp.le.s32.totalorder 1, %s12
      %p108 = scmp.lt.s32.totalorder %s12, 5
      %p109 = pnand %p107, %p108
      %p110 = pneg %p109
      // Predicated region
      $region9: #{tpu_custom_call.1} parent=5 // pred_check
        _
      $region10: #{tpu_custom_call.1} parent=5 // pred_check_branch
        %112 = sbr.rel (%p109) target = $region12
      $region11: #{tpu_custom_call.1} parent=5 // pred_region
        %s113 = ssub.s32 %s12, 1
        // Predicated region
        $region13: #{tpu_custom_call.1} parent=11 // pred_check
          %p114 = pneg %p71
        $region14: #{tpu_custom_call.1} parent=11 // pred_check_branch
          %116 = sbr.rel (%p114) target = $region16
        $region15: #{tpu_custom_call.1} parent=11 // pred_region
          %s118 = ssub.s32 32, 32
          %119 = vsyncadd [#allocation4], %s118
          %s121 = sshll.u32 %s1, 4
          %s122 = int_to_ptr.vmem [resolvable:$true] %s121
          %124 = dma.vmem_to_smem %s122, 32, [#allocation2], [#allocation4]
        $region16: #{tpu_custom_call.1} parent=11 // pred_fallthru
          _
      $region12: #{tpu_custom_call.1} parent=5 // pred_fallthru
        _
      %p125 = scmp.lt.s32.totalorder %s12, 4
      // Predicated region
      $region17: #{tpu_custom_call.1} parent=5 // pred_check
        %p126 = pneg %p125
      $region18: #{tpu_custom_call.1} parent=5 // pred_check_branch
        %128 = sbr.rel (%p126) target = $region20
      $region19: #{tpu_custom_call.1} parent=5 // pred_region
        // Predicated region
        $region21: #{tpu_custom_call.1} parent=19 // pred_check
          %p129 = pneg %p44
        $region22: #{tpu_custom_call.1} parent=19 // pred_check_branch
          %131 = sbr.rel (%p129) target = $region24
        $region23: #{tpu_custom_call.1} parent=19 // pred_region
          %p132 = scmp.lt.s32.totalorder %s19, 1
          %s133 = scalar_select %p132, %s19, 1
          %s134 = smul.addr %s133, 3
          %s135 = smul.addr %s134, 8
          %s136 = scalar_lea.vmem %s0, %s135
        $region24: #{tpu_custom_call.1} parent=19 // pred_fallthru
          _
      $region20: #{tpu_custom_call.1} parent=5 // pred_fallthru
        _
      %p137 = scmp.le.s32.totalorder 1, %s12
      %p138 = scmp.lt.s32.totalorder %s12, 5
      %p139 = pnand %p137, %p138
      %p140 = pneg %p139
      // Predicated region
      $region25: #{tpu_custom_call.1} parent=5 // pred_check
        _
      $region26: #{tpu_custom_call.1} parent=5 // pred_check_branch
        %142 = sbr.rel (%p139) target = $region28
      $region27: #{tpu_custom_call.1} parent=5 // pred_region
        %s143 = ssub.s32 %s12, 1
        // Predicated region
        $region29: #{tpu_custom_call.1} parent=27 // pred_check
          %p144 = pneg %p71
        $region30: #{tpu_custom_call.1} parent=27 // pred_check_branch
          %146 = sbr.rel (%p144) target = $region32
        $region31: #{tpu_custom_call.1} parent=27 // pred_region
          %147 = dma.done [#allocation4], 32
        $region32: #{tpu_custom_call.1} parent=27 // pred_fallthru
          _
        %148 = sfence
        %p149 = scmp.lt.s32.totalorder %s21, 1
        %s150 = scalar_select %p149, %s21, 1
        %s151 = smul.addr %s150, 3
        %s152 = smul.addr %s151, 8
        %s153 = scalar_lea.vmem %s0, %s152
        %p154 = pneg %p50
        %p155 = pneg %p47
        %p156 = pneg %p71
        %p157 = pneg %p68
        %p158 = pneg %p99
        %p159 = pneg %p96
        %s160 = sand.u32 %s86, 1
        %s161 = scalar_lea.sflag [#allocation3], %s160
        %s162 = sand.u32 %s86, 1
        %s163 = smul.addr %s162, 32
        %s164 = scalar_lea.vmem [#allocation5], %s163
        %p165 = scmp.lt.s32.totalorder %s21, 1
        %s166 = scalar_select %p165, %s21, 1
        %s167 = smul.addr %s166, 3
        %s168 = smul.addr %s167, 8
        %s169 = scalar_lea.vmem %s0, %s168
        %s170 = smul.u32 %s22, 8
        %s171 = scalar_lea.vmem %s169, %s170
        %v172 = vld [vmem:[%s171] sm:$0xff]
        %s173 = sld [smem:[#allocation2]]
        %v174 = vstv %s173
        %v175 = vmul.f32 %v174, %v172
        %v176 = vadd.f32 %v175, 0.0
        %s177 = sld [smem:[#allocation2 + $0x31]]
        %v178 = vstv %s177
        %v179 = vmul.f32 %v178, %v172
        %v180 = vadd.f32 %v179, 0.0
        %s181 = sld [smem:[#allocation2 + $0x62]]
        %v182 = vstv %s181
        %v183 = vmul.f32 %v182, %v172
        %v184 = vadd.f32 %v183, 0.0
        %s185 = sld [smem:[#allocation2 + $0x93]]
        %v186 = vstv %s185
        %v187 = vmul.f32 %v186, %v172
        %v188 = vadd.f32 %v187, 0.0
        %s189 = sld [smem:[#allocation2 + $0x1]]
        %v190 = vstv %s189
        %v191 = vmul.f32 %v190, %v172
        %193 = vrot.lane.b32.xlu0 %v191, 127
        %v194 = vpop.permute.xlu0 %193
        %v196 = vadd.f32 %v176, %v194
        %s197 = sld [smem:[#allocation2 + $0x32]]
        %v198 = vstv %s197
        %v199 = vmul.f32 %v198, %v172
        %201 = vrot.lane.b32.xlu0 %v199, 127
        %v202 = vpop.permute.xlu0 %201
        %v204 = vadd.f32 %v180, %v202
        %s205 = sld [smem:[#allocation2 + $0x63]]
        %v206 = vstv %s205
        %v207 = vmul.f32 %v206, %v172
        %209 = vrot.lane.b32.xlu0 %v207, 127
        %v210 = vpop.permute.xlu0 %209
        %v212 = vadd.f32 %v184, %v210
        %s213 = sld [smem:[#allocation2 + $0x94]]
        %v214 = vstv %s213
        %v215 = vmul.f32 %v214, %v172
        %217 = vrot.lane.b32.xlu0 %v215, 127
        %v218 = vpop.permute.xlu0 %217
        %v220 = vadd.f32 %v188, %v218
        %s221 = sld [smem:[#allocation2 + $0x2]]
        %v222 = vstv %s221
        %v223 = vmul.f32 %v222, %v172
        %225 = vrot.lane.b32.xlu0 %v223, 126
        %v226 = vpop.permute.xlu0 %225
        %v228 = vadd.f32 %v196, %v226
        %s229 = sld [smem:[#allocation2 + $0x33]]
        %v230 = vstv %s229
        %v231 = vmul.f32 %v230, %v172
        %233 = vrot.lane.b32.xlu0 %v231, 126
        %v234 = vpop.permute.xlu0 %233
        %v236 = vadd.f32 %v204, %v234
        %s237 = sld [smem:[#allocation2 + $0x64]]
        %v238 = vstv %s237
        %v239 = vmul.f32 %v238, %v172
        %241 = vrot.lane.b32.xlu0 %v239, 126
        %v242 = vpop.permute.xlu0 %241
        %v244 = vadd.f32 %v212, %v242
        %s245 = sld [smem:[#allocation2 + $0x95]]
        %v246 = vstv %s245
        %v247 = vmul.f32 %v246, %v172
        %249 = vrot.lane.b32.xlu0 %v247, 126
        %v250 = vpop.permute.xlu0 %249
        %v252 = vadd.f32 %v220, %v250
        %s253 = sld [smem:[#allocation2 + $0x3]]
        %v254 = vstv %s253
        %v255 = vmul.f32 %v254, %v172
        %257 = vrot.lane.b32.xlu0 %v255, 125
        %v258 = vpop.permute.xlu0 %257
        %v260 = vadd.f32 %v228, %v258
        %s261 = sld [smem:[#allocation2 + $0x34]]
        %v262 = vstv %s261
        %v263 = vmul.f32 %v262, %v172
        %265 = vrot.lane.b32.xlu0 %v263, 125
        %v266 = vpop.permute.xlu0 %265
        %v268 = vadd.f32 %v236, %v266
        %s269 = sld [smem:[#allocation2 + $0x65]]
        %v270 = vstv %s269
        %v271 = vmul.f32 %v270, %v172
        %273 = vrot.lane.b32.xlu0 %v271, 125
        %v274 = vpop.permute.xlu0 %273
        %v276 = vadd.f32 %v244, %v274
        %s277 = sld [smem:[#allocation2 + $0x96]]
        %v278 = vstv %s277
        %v279 = vmul.f32 %v278, %v172
        %281 = vrot.lane.b32.xlu0 %v279, 125
        %v282 = vpop.permute.xlu0 %281
        %v284 = vadd.f32 %v252, %v282
        %s285 = sld [smem:[#allocation2 + $0x4]]
        %v286 = vstv %s285
        %v287 = vmul.f32 %v286, %v172
        %289 = vrot.lane.b32.xlu0 %v287, 124
        %v290 = vpop.permute.xlu0 %289
        %v292 = vadd.f32 %v260, %v290
        %s293 = sld [smem:[#allocation2 + $0x35]]
        %v294 = vstv %s293
        %v295 = vmul.f32 %v294, %v172
        %297 = vrot.lane.b32.xlu0 %v295, 124
        %v298 = vpop.permute.xlu0 %297
        %v300 = vadd.f32 %v268, %v298
        %s301 = sld [smem:[#allocation2 + $0x66]]
        %v302 = vstv %s301
        %v303 = vmul.f32 %v302, %v172
        %305 = vrot.lane.b32.xlu0 %v303, 124
        %v306 = vpop.permute.xlu0 %305
        %v308 = vadd.f32 %v276, %v306
        %s309 = sld [smem:[#allocation2 + $0x97]]
        %v310 = vstv %s309
        %v311 = vmul.f32 %v310, %v172
        %313 = vrot.lane.b32.xlu0 %v311, 124
        %v314 = vpop.permute.xlu0 %313
        %v316 = vadd.f32 %v284, %v314
        %s317 = sld [smem:[#allocation2 + $0x5]]
        %v318 = vstv %s317
        %v319 = vmul.f32 %v318, %v172
        %321 = vrot.lane.b32.xlu0 %v319, 123
        %v322 = vpop.permute.xlu0 %321
        %v324 = vadd.f32 %v292, %v322
        %s325 = sld [smem:[#allocation2 + $0x36]]
        %v326 = vstv %s325
        %v327 = vmul.f32 %v326, %v172
        %329 = vrot.lane.b32.xlu0 %v327, 123
        %v330 = vpop.permute.xlu0 %329
        %v332 = vadd.f32 %v300, %v330
        %s333 = sld [smem:[#allocation2 + $0x67]]
        %v334 = vstv %s333
        %v335 = vmul.f32 %v334, %v172
        %337 = vrot.lane.b32.xlu0 %v335, 123
        %v338 = vpop.permute.xlu0 %337
        %v340 = vadd.f32 %v308, %v338
        %s341 = sld [smem:[#allocation2 + $0x98]]
        %v342 = vstv %s341
        %v343 = vmul.f32 %v342, %v172
        %345 = vrot.lane.b32.xlu0 %v343, 123
        %v346 = vpop.permute.xlu0 %345
        %v348 = vadd.f32 %v316, %v346
        %s349 = sld [smem:[#allocation2 + $0x6]]
        %v350 = vstv %s349
        %v351 = vmul.f32 %v350, %v172
        %353 = vrot.lane.b32.xlu0 %v351, 122
        %v354 = vpop.permute.xlu0 %353
        %v356 = vadd.f32 %v324, %v354
        %s357 = sld [smem:[#allocation2 + $0x37]]
        %v358 = vstv %s357
        %v359 = vmul.f32 %v358, %v172
        %361 = vrot.lane.b32.xlu0 %v359, 122
        %v362 = vpop.permute.xlu0 %361
        %v364 = vadd.f32 %v332, %v362
        %s365 = sld [smem:[#allocation2 + $0x68]]
        %v366 = vstv %s365
        %v367 = vmul.f32 %v366, %v172
        %369 = vrot.lane.b32.xlu0 %v367, 122
        %v370 = vpop.permute.xlu0 %369
        %v372 = vadd.f32 %v340, %v370
        %s373 = sld [smem:[#allocation2 + $0x99]]
        %v374 = vstv %s373
        %v375 = vmul.f32 %v374, %v172
        %377 = vrot.lane.b32.xlu0 %v375, 122
        %v378 = vpop.permute.xlu0 %377
        %v380 = vadd.f32 %v348, %v378
        %s381 = sadd.s32 %s170, 1
        %s382 = scalar_lea.vmem %s169, %s381
        %v383 = vld [vmem:[%s382] sm:$0xff]
        %s384 = sld [smem:[#allocation2 + $0x7]]
        %v385 = vstv %s384
        %v386 = vmul.f32 %v385, %v383
        %v387 = vadd.f32 %v356, %v386
        %s388 = sld [smem:[#allocation2 + $0x38]]
        %v389 = vstv %s388
        %v390 = vmul.f32 %v389, %v383
        %v391 = vadd.f32 %v364, %v390
        %s392 = sld [smem:[#allocation2 + $0x69]]
        %v393 = vstv %s392
        %v394 = vmul.f32 %v393, %v383
        %v395 = vadd.f32 %v372, %v394
        %s396 = sld [smem:[#allocation2 + $0x9a]]
        %v397 = vstv %s396
        %v398 = vmul.f32 %v397, %v383
        %v399 = vadd.f32 %v380, %v398
        %s400 = sld [smem:[#allocation2 + $0x8]]
        %v401 = vstv %s400
        %v402 = vmul.f32 %v401, %v383
        %404 = vrot.lane.b32.xlu0 %v402, 127
        %v405 = vpop.permute.xlu0 %404
        %v407 = vadd.f32 %v387, %v405
        %s408 = sld [smem:[#allocation2 + $0x39]]
        %v409 = vstv %s408
        %v410 = vmul.f32 %v409, %v383
        %412 = vrot.lane.b32.xlu0 %v410, 127
        %v413 = vpop.permute.xlu0 %412
        %v415 = vadd.f32 %v391, %v413
        %s416 = sld [smem:[#allocation2 + $0x6a]]
        %v417 = vstv %s416
        %v418 = vmul.f32 %v417, %v383
        %420 = vrot.lane.b32.xlu0 %v418, 127
        %v421 = vpop.permute.xlu0 %420
        %v423 = vadd.f32 %v395, %v421
        %s424 = sld [smem:[#allocation2 + $0x9b]]
        %v425 = vstv %s424
        %v426 = vmul.f32 %v425, %v383
        %428 = vrot.lane.b32.xlu0 %v426, 127
        %v429 = vpop.permute.xlu0 %428
        %v431 = vadd.f32 %v399, %v429
        %s432 = sld [smem:[#allocation2 + $0x9]]
        %v433 = vstv %s432
        %v434 = vmul.f32 %v433, %v383
        %436 = vrot.lane.b32.xlu0 %v434, 126
        %v437 = vpop.permute.xlu0 %436
        %v439 = vadd.f32 %v407, %v437
        %s440 = sld [smem:[#allocation2 + $0x3a]]
        %v441 = vstv %s440
        %v442 = vmul.f32 %v441, %v383
        %444 = vrot.lane.b32.xlu0 %v442, 126
        %v445 = vpop.permute.xlu0 %444
        %v447 = vadd.f32 %v415, %v445
        %s448 = sld [smem:[#allocation2 + $0x6b]]
        %v449 = vstv %s448
        %v450 = vmul.f32 %v449, %v383
        %452 = vrot.lane.b32.xlu0 %v450, 126
        %v453 = vpop.permute.xlu0 %452
        %v455 = vadd.f32 %v423, %v453
        %s456 = sld [smem:[#allocation2 + $0x9c]]
        %v457 = vstv %s456
        %v458 = vmul.f32 %v457, %v383
        %460 = vrot.lane.b32.xlu0 %v458, 126
        %v461 = vpop.permute.xlu0 %460
        %v463 = vadd.f32 %v431, %v461
        %s464 = sld [smem:[#allocation2 + $0xa]]
        %v465 = vstv %s464
        %v466 = vmul.f32 %v465, %v383
        %468 = vrot.lane.b32.xlu0 %v466, 125
        %v469 = vpop.permute.xlu0 %468
        %v471 = vadd.f32 %v439, %v469
        %s472 = sld [smem:[#allocation2 + $0x3b]]
        %v473 = vstv %s472
        %v474 = vmul.f32 %v473, %v383
        %476 = vrot.lane.b32.xlu0 %v474, 125
        %v477 = vpop.permute.xlu0 %476
        %v479 = vadd.f32 %v447, %v477
        %s480 = sld [smem:[#allocation2 + $0x6c]]
        %v481 = vstv %s480
        %v482 = vmul.f32 %v481, %v383
        %484 = vrot.lane.b32.xlu0 %v482, 125
        %v485 = vpop.permute.xlu0 %484
        %v487 = vadd.f32 %v455, %v485
        %s488 = sld [smem:[#allocation2 + $0x9d]]
        %v489 = vstv %s488
        %v490 = vmul.f32 %v489, %v383
        %492 = vrot.lane.b32.xlu0 %v490, 125
        %v493 = vpop.permute.xlu0 %492
        %v495 = vadd.f32 %v463, %v493
        %s496 = sld [smem:[#allocation2 + $0xb]]
        %v497 = vstv %s496
        %v498 = vmul.f32 %v497, %v383
        %500 = vrot.lane.b32.xlu0 %v498, 124
        %v501 = vpop.permute.xlu0 %500
        %v503 = vadd.f32 %v471, %v501
        %s504 = sld [smem:[#allocation2 + $0x3c]]
        %v505 = vstv %s504
        %v506 = vmul.f32 %v505, %v383
        %508 = vrot.lane.b32.xlu0 %v506, 124
        %v509 = vpop.permute.xlu0 %508
        %v511 = vadd.f32 %v479, %v509
        %s512 = sld [smem:[#allocation2 + $0x6d]]
        %v513 = vstv %s512
        %v514 = vmul.f32 %v513, %v383
        %516 = vrot.lane.b32.xlu0 %v514, 124
        %v517 = vpop.permute.xlu0 %516
        %v519 = vadd.f32 %v487, %v517
        %s520 = sld [smem:[#allocation2 + $0x9e]]
        %v521 = vstv %s520
        %v522 = vmul.f32 %v521, %v383
        %524 = vrot.lane.b32.xlu0 %v522, 124
        %v525 = vpop.permute.xlu0 %524
        %v527 = vadd.f32 %v495, %v525
        %s528 = sld [smem:[#allocation2 + $0xc]]
        %v529 = vstv %s528
        %v530 = vmul.f32 %v529, %v383
        %532 = vrot.lane.b32.xlu0 %v530, 123
        %v533 = vpop.permute.xlu0 %532
        %v535 = vadd.f32 %v503, %v533
        %s536 = sld [smem:[#allocation2 + $0x3d]]
        %v537 = vstv %s536
        %v538 = vmul.f32 %v537, %v383
        %540 = vrot.lane.b32.xlu0 %v538, 123
        %v541 = vpop.permute.xlu0 %540
        %v543 = vadd.f32 %v511, %v541
        %s544 = sld [smem:[#allocation2 + $0x6e]]
        %v545 = vstv %s544
        %v546 = vmul.f32 %v545, %v383
        %548 = vrot.lane.b32.xlu0 %v546, 123
        %v549 = vpop.permute.xlu0 %548
        %v551 = vadd.f32 %v519, %v549
        %s552 = sld [smem:[#allocation2 + $0x9f]]
        %v553 = vstv %s552
        %v554 = vmul.f32 %v553, %v383
        %556 = vrot.lane.b32.xlu0 %v554, 123
        %v557 = vpop.permute.xlu0 %556
        %v559 = vadd.f32 %v527, %v557
        %s560 = sld [smem:[#allocation2 + $0xd]]
        %v561 = vstv %s560
        %v562 = vmul.f32 %v561, %v383
        %564 = vrot.lane.b32.xlu0 %v562, 122
        %v565 = vpop.permute.xlu0 %564
        %v567 = vadd.f32 %v535, %v565
        %s568 = sld [smem:[#allocation2 + $0x3e]]
        %v569 = vstv %s568
        %v570 = vmul.f32 %v569, %v383
        %572 = vrot.lane.b32.xlu0 %v570, 122
        %v573 = vpop.permute.xlu0 %572
        %v575 = vadd.f32 %v543, %v573
        %s576 = sld [smem:[#allocation2 + $0x6f]]
        %v577 = vstv %s576
        %v578 = vmul.f32 %v577, %v383
        %580 = vrot.lane.b32.xlu0 %v578, 122
        %v581 = vpop.permute.xlu0 %580
        %v583 = vadd.f32 %v551, %v581
        %s584 = sld [smem:[#allocation2 + $0xa0]]
        %v585 = vstv %s584
        %v586 = vmul.f32 %v585, %v383
        %588 = vrot.lane.b32.xlu0 %v586, 122
        %v589 = vpop.permute.xlu0 %588
        %v591 = vadd.f32 %v559, %v589
        %s592 = sadd.s32 %s170, 2
        %s593 = scalar_lea.vmem %s169, %s592
        %v594 = vld [vmem:[%s593] sm:$0xff]
        %s595 = sld [smem:[#allocation2 + $0xe]]
        %v596 = vstv %s595
        %v597 = vmul.f32 %v596, %v594
        %v598 = vadd.f32 %v567, %v597
        %s599 = sld [smem:[#allocation2 + $0x3f]]
        %v600 = vstv %s599
        %v601 = vmul.f32 %v600, %v594
        %v602 = vadd.f32 %v575, %v601
        %s603 = sld [smem:[#allocation2 + $0x70]]
        %v604 = vstv %s603
        %v605 = vmul.f32 %v604, %v594
        %v606 = vadd.f32 %v583, %v605
        %s607 = sld [smem:[#allocation2 + $0xa1]]
        %v608 = vstv %s607
        %v609 = vmul.f32 %v608, %v594
        %v610 = vadd.f32 %v591, %v609
        %s611 = sld [smem:[#allocation2 + $0xf]]
        %v612 = vstv %s611
        %v613 = vmul.f32 %v612, %v594
        %615 = vrot.lane.b32.xlu0 %v613, 127
        %v616 = vpop.permute.xlu0 %615
        %v618 = vadd.f32 %v598, %v616
        %s619 = sld [smem:[#allocation2 + $0x40]]
        %v620 = vstv %s619
        %v621 = vmul.f32 %v620, %v594
        %623 = vrot.lane.b32.xlu0 %v621, 127
        %v624 = vpop.permute.xlu0 %623
        %v626 = vadd.f32 %v602, %v624
        %s627 = sld [smem:[#allocation2 + $0x71]]
        %v628 = vstv %s627
        %v629 = vmul.f32 %v628, %v594
        %631 = vrot.lane.b32.xlu0 %v629, 127
        %v632 = vpop.permute.xlu0 %631
        %v634 = vadd.f32 %v606, %v632
        %s635 = sld [smem:[#allocation2 + $0xa2]]
        %v636 = vstv %s635
        %v637 = vmul.f32 %v636, %v594
        %639 = vrot.lane.b32.xlu0 %v637, 127
        %v640 = vpop.permute.xlu0 %639
        %v642 = vadd.f32 %v610, %v640
        %s643 = sld [smem:[#allocation2 + $0x10]]
        %v644 = vstv %s643
        %v645 = vmul.f32 %v644, %v594
        %647 = vrot.lane.b32.xlu0 %v645, 126
        %v648 = vpop.permute.xlu0 %647
        %v650 = vadd.f32 %v618, %v648
        %s651 = sld [smem:[#allocation2 + $0x41]]
        %v652 = vstv %s651
        %v653 = vmul.f32 %v652, %v594
        %655 = vrot.lane.b32.xlu0 %v653, 126
        %v656 = vpop.permute.xlu0 %655
        %v658 = vadd.f32 %v626, %v656
        %s659 = sld [smem:[#allocation2 + $0x72]]
        %v660 = vstv %s659
        %v661 = vmul.f32 %v660, %v594
        %663 = vrot.lane.b32.xlu0 %v661, 126
        %v664 = vpop.permute.xlu0 %663
        %v666 = vadd.f32 %v634, %v664
        %s667 = sld [smem:[#allocation2 + $0xa3]]
        %v668 = vstv %s667
        %v669 = vmul.f32 %v668, %v594
        %671 = vrot.lane.b32.xlu0 %v669, 126
        %v672 = vpop.permute.xlu0 %671
        %v674 = vadd.f32 %v642, %v672
        %s675 = sld [smem:[#allocation2 + $0x11]]
        %v676 = vstv %s675
        %v677 = vmul.f32 %v676, %v594
        %679 = vrot.lane.b32.xlu0 %v677, 125
        %v680 = vpop.permute.xlu0 %679
        %v682 = vadd.f32 %v650, %v680
        %s683 = sld [smem:[#allocation2 + $0x42]]
        %v684 = vstv %s683
        %v685 = vmul.f32 %v684, %v594
        %687 = vrot.lane.b32.xlu0 %v685, 125
        %v688 = vpop.permute.xlu0 %687
        %v690 = vadd.f32 %v658, %v688
        %s691 = sld [smem:[#allocation2 + $0x73]]
        %v692 = vstv %s691
        %v693 = vmul.f32 %v692, %v594
        %695 = vrot.lane.b32.xlu0 %v693, 125
        %v696 = vpop.permute.xlu0 %695
        %v698 = vadd.f32 %v666, %v696
        %s699 = sld [smem:[#allocation2 + $0xa4]]
        %v700 = vstv %s699
        %v701 = vmul.f32 %v700, %v594
        %703 = vrot.lane.b32.xlu0 %v701, 125
        %v704 = vpop.permute.xlu0 %703
        %v706 = vadd.f32 %v674, %v704
        %s707 = sld [smem:[#allocation2 + $0x12]]
        %v708 = vstv %s707
        %v709 = vmul.f32 %v708, %v594
        %711 = vrot.lane.b32.xlu0 %v709, 124
        %v712 = vpop.permute.xlu0 %711
        %v714 = vadd.f32 %v682, %v712
        %s715 = sld [smem:[#allocation2 + $0x43]]
        %v716 = vstv %s715
        %v717 = vmul.f32 %v716, %v594
        %719 = vrot.lane.b32.xlu0 %v717, 124
        %v720 = vpop.permute.xlu0 %719
        %v722 = vadd.f32 %v690, %v720
        %s723 = sld [smem:[#allocation2 + $0x74]]
        %v724 = vstv %s723
        %v725 = vmul.f32 %v724, %v594
        %727 = vrot.lane.b32.xlu0 %v725, 124
        %v728 = vpop.permute.xlu0 %727
        %v730 = vadd.f32 %v698, %v728
        %s731 = sld [smem:[#allocation2 + $0xa5]]
        %v732 = vstv %s731
        %v733 = vmul.f32 %v732, %v594
        %735 = vrot.lane.b32.xlu0 %v733, 124
        %v736 = vpop.permute.xlu0 %735
        %v738 = vadd.f32 %v706, %v736
        %s739 = sld [smem:[#allocation2 + $0x13]]
        %v740 = vstv %s739
        %v741 = vmul.f32 %v740, %v594
        %743 = vrot.lane.b32.xlu0 %v741, 123
        %v744 = vpop.permute.xlu0 %743
        %v746 = vadd.f32 %v714, %v744
        %s747 = sld [smem:[#allocation2 + $0x44]]
        %v748 = vstv %s747
        %v749 = vmul.f32 %v748, %v594
        %751 = vrot.lane.b32.xlu0 %v749, 123
        %v752 = vpop.permute.xlu0 %751
        %v754 = vadd.f32 %v722, %v752
        %s755 = sld [smem:[#allocation2 + $0x75]]
        %v756 = vstv %s755
        %v757 = vmul.f32 %v756, %v594
        %759 = vrot.lane.b32.xlu0 %v757, 123
        %v760 = vpop.permute.xlu0 %759
        %v762 = vadd.f32 %v730, %v760
        %s763 = sld [smem:[#allocation2 + $0xa6]]
        %v764 = vstv %s763
        %v765 = vmul.f32 %v764, %v594
        %767 = vrot.lane.b32.xlu0 %v765, 123
        %v768 = vpop.permute.xlu0 %767
        %v770 = vadd.f32 %v738, %v768
        %s771 = sld [smem:[#allocation2 + $0x14]]
        %v772 = vstv %s771
        %v773 = vmul.f32 %v772, %v594
        %775 = vrot.lane.b32.xlu0 %v773, 122
        %v776 = vpop.permute.xlu0 %775
        %v778 = vadd.f32 %v746, %v776
        %s779 = sld [smem:[#allocation2 + $0x45]]
        %v780 = vstv %s779
        %v781 = vmul.f32 %v780, %v594
        %783 = vrot.lane.b32.xlu0 %v781, 122
        %v784 = vpop.permute.xlu0 %783
        %v786 = vadd.f32 %v754, %v784
        %s787 = sld [smem:[#allocation2 + $0x76]]
        %v788 = vstv %s787
        %v789 = vmul.f32 %v788, %v594
        %791 = vrot.lane.b32.xlu0 %v789, 122
        %v792 = vpop.permute.xlu0 %791
        %v794 = vadd.f32 %v762, %v792
        %s795 = sld [smem:[#allocation2 + $0xa7]]
        %v796 = vstv %s795
        %v797 = vmul.f32 %v796, %v594
        %799 = vrot.lane.b32.xlu0 %v797, 122
        %v800 = vpop.permute.xlu0 %799
        %v802 = vadd.f32 %v770, %v800
        %s803 = sadd.s32 %s170, 3
        %s804 = scalar_lea.vmem %s169, %s803
        %v805 = vld [vmem:[%s804] sm:$0xff]
        %s806 = sld [smem:[#allocation2 + $0x15]]
        %v807 = vstv %s806
        %v808 = vmul.f32 %v807, %v805
        %v809 = vadd.f32 %v778, %v808
        %s810 = sld [smem:[#allocation2 + $0x46]]
        %v811 = vstv %s810
        %v812 = vmul.f32 %v811, %v805
        %v813 = vadd.f32 %v786, %v812
        %s814 = sld [smem:[#allocation2 + $0x77]]
        %v815 = vstv %s814
        %v816 = vmul.f32 %v815, %v805
        %v817 = vadd.f32 %v794, %v816
        %s818 = sld [smem:[#allocation2 + $0xa8]]
        %v819 = vstv %s818
        %v820 = vmul.f32 %v819, %v805
        %v821 = vadd.f32 %v802, %v820
        %s822 = sld [smem:[#allocation2 + $0x16]]
        %v823 = vstv %s822
        %v824 = vmul.f32 %v823, %v805
        %826 = vrot.lane.b32.xlu0 %v824, 127
        %v827 = vpop.permute.xlu0 %826
        %v829 = vadd.f32 %v809, %v827
        %s830 = sld [smem:[#allocation2 + $0x47]]
        %v831 = vstv %s830
        %v832 = vmul.f32 %v831, %v805
        %834 = vrot.lane.b32.xlu0 %v832, 127
        %v835 = vpop.permute.xlu0 %834
        %v837 = vadd.f32 %v813, %v835
        %s838 = sld [smem:[#allocation2 + $0x78]]
        %v839 = vstv %s838
        %v840 = vmul.f32 %v839, %v805
        %842 = vrot.lane.b32.xlu0 %v840, 127
        %v843 = vpop.permute.xlu0 %842
        %v845 = vadd.f32 %v817, %v843
        %s846 = sld [smem:[#allocation2 + $0xa9]]
        %v847 = vstv %s846
        %v848 = vmul.f32 %v847, %v805
        %850 = vrot.lane.b32.xlu0 %v848, 127
        %v851 = vpop.permute.xlu0 %850
        %v853 = vadd.f32 %v821, %v851
        %s854 = sld [smem:[#allocation2 + $0x17]]
        %v855 = vstv %s854
        %v856 = vmul.f32 %v855, %v805
        %858 = vrot.lane.b32.xlu0 %v856, 126
        %v859 = vpop.permute.xlu0 %858
        %v861 = vadd.f32 %v829, %v859
        %s862 = sld [smem:[#allocation2 + $0x48]]
        %v863 = vstv %s862
        %v864 = vmul.f32 %v863, %v805
        %866 = vrot.lane.b32.xlu0 %v864, 126
        %v867 = vpop.permute.xlu0 %866
        %v869 = vadd.f32 %v837, %v867
        %s870 = sld [smem:[#allocation2 + $0x79]]
        %v871 = vstv %s870
        %v872 = vmul.f32 %v871, %v805
        %874 = vrot.lane.b32.xlu0 %v872, 126
        %v875 = vpop.permute.xlu0 %874
        %v877 = vadd.f32 %v845, %v875
        %s878 = sld [smem:[#allocation2 + $0xaa]]
        %v879 = vstv %s878
        %v880 = vmul.f32 %v879, %v805
        %882 = vrot.lane.b32.xlu0 %v880, 126
        %v883 = vpop.permute.xlu0 %882
        %v885 = vadd.f32 %v853, %v883
        %s886 = sld [smem:[#allocation2 + $0x18]]
        %v887 = vstv %s886
        %v888 = vmul.f32 %v887, %v805
        %890 = vrot.lane.b32.xlu0 %v888, 125
        %v891 = vpop.permute.xlu0 %890
        %v893 = vadd.f32 %v861, %v891
        %s894 = sld [smem:[#allocation2 + $0x49]]
        %v895 = vstv %s894
        %v896 = vmul.f32 %v895, %v805
        %898 = vrot.lane.b32.xlu0 %v896, 125
        %v899 = vpop.permute.xlu0 %898
        %v901 = vadd.f32 %v869, %v899
        %s902 = sld [smem:[#allocation2 + $0x7a]]
        %v903 = vstv %s902
        %v904 = vmul.f32 %v903, %v805
        %906 = vrot.lane.b32.xlu0 %v904, 125
        %v907 = vpop.permute.xlu0 %906
        %v909 = vadd.f32 %v877, %v907
        %s910 = sld [smem:[#allocation2 + $0xab]]
        %v911 = vstv %s910
        %v912 = vmul.f32 %v911, %v805
        %914 = vrot.lane.b32.xlu0 %v912, 125
        %v915 = vpop.permute.xlu0 %914
        %v917 = vadd.f32 %v885, %v915
        %s918 = sld [smem:[#allocation2 + $0x19]]
        %v919 = vstv %s918
        %v920 = vmul.f32 %v919, %v805
        %922 = vrot.lane.b32.xlu0 %v920, 124
        %v923 = vpop.permute.xlu0 %922
        %v925 = vadd.f32 %v893, %v923
        %s926 = sld [smem:[#allocation2 + $0x4a]]
        %v927 = vstv %s926
        %v928 = vmul.f32 %v927, %v805
        %930 = vrot.lane.b32.xlu0 %v928, 124
        %v931 = vpop.permute.xlu0 %930
        %v933 = vadd.f32 %v901, %v931
        %s934 = sld [smem:[#allocation2 + $0x7b]]
        %v935 = vstv %s934
        %v936 = vmul.f32 %v935, %v805
        %938 = vrot.lane.b32.xlu0 %v936, 124
        %v939 = vpop.permute.xlu0 %938
        %v941 = vadd.f32 %v909, %v939
        %s942 = sld [smem:[#allocation2 + $0xac]]
        %v943 = vstv %s942
        %v944 = vmul.f32 %v943, %v805
        %946 = vrot.lane.b32.xlu0 %v944, 124
        %v947 = vpop.permute.xlu0 %946
        %v949 = vadd.f32 %v917, %v947
        %s950 = sld [smem:[#allocation2 + $0x1a]]
        %v951 = vstv %s950
        %v952 = vmul.f32 %v951, %v805
        %954 = vrot.lane.b32.xlu0 %v952, 123
        %v955 = vpop.permute.xlu0 %954
        %v957 = vadd.f32 %v925, %v955
        %s958 = sld [smem:[#allocation2 + $0x4b]]
        %v959 = vstv %s958
        %v960 = vmul.f32 %v959, %v805
        %962 = vrot.lane.b32.xlu0 %v960, 123
        %v963 = vpop.permute.xlu0 %962
        %v965 = vadd.f32 %v933, %v963
        %s966 = sld [smem:[#allocation2 + $0x7c]]
        %v967 = vstv %s966
        %v968 = vmul.f32 %v967, %v805
        %970 = vrot.lane.b32.xlu0 %v968, 123
        %v971 = vpop.permute.xlu0 %970
        %v973 = vadd.f32 %v941, %v971
        %s974 = sld [smem:[#allocation2 + $0xad]]
        %v975 = vstv %s974
        %v976 = vmul.f32 %v975, %v805
        %978 = vrot.lane.b32.xlu0 %v976, 123
        %v979 = vpop.permute.xlu0 %978
        %v981 = vadd.f32 %v949, %v979
        %s982 = sld [smem:[#allocation2 + $0x1b]]
        %v983 = vstv %s982
        %v984 = vmul.f32 %v983, %v805
        %986 = vrot.lane.b32.xlu0 %v984, 122
        %v987 = vpop.permute.xlu0 %986
        %v989 = vadd.f32 %v957, %v987
        %s990 = sld [smem:[#allocation2 + $0x4c]]
        %v991 = vstv %s990
        %v992 = vmul.f32 %v991, %v805
        %994 = vrot.lane.b32.xlu0 %v992, 122
        %v995 = vpop.permute.xlu0 %994
        %v997 = vadd.f32 %v965, %v995
        %s998 = sld [smem:[#allocation2 + $0x7d]]
        %v999 = vstv %s998
        %v1000 = vmul.f32 %v999, %v805
        %1002 = vrot.lane.b32.xlu0 %v1000, 122
        %v1003 = vpop.permute.xlu0 %1002
        %v1005 = vadd.f32 %v973, %v1003
        %s1006 = sld [smem:[#allocation2 + $0xae]]
        %v1007 = vstv %s1006
        %v1008 = vmul.f32 %v1007, %v805
        %1010 = vrot.lane.b32.xlu0 %v1008, 122
        %v1011 = vpop.permute.xlu0 %1010
        %v1013 = vadd.f32 %v981, %v1011
        %s1014 = sadd.s32 %s170, 4
        %s1015 = scalar_lea.vmem %s169, %s1014
        %v1016 = vld [vmem:[%s1015] sm:$0xff]
        %s1017 = sld [smem:[#allocation2 + $0x1c]]
        %v1018 = vstv %s1017
        %v1019 = vmul.f32 %v1018, %v1016
        %v1020 = vadd.f32 %v989, %v1019
        %s1021 = sld [smem:[#allocation2 + $0x4d]]
        %v1022 = vstv %s1021
        %v1023 = vmul.f32 %v1022, %v1016
        %v1024 = vadd.f32 %v997, %v1023
        %s1025 = sld [smem:[#allocation2 + $0x7e]]
        %v1026 = vstv %s1025
        %v1027 = vmul.f32 %v1026, %v1016
        %v1028 = vadd.f32 %v1005, %v1027
        %s1029 = sld [smem:[#allocation2 + $0xaf]]
        %v1030 = vstv %s1029
        %v1031 = vmul.f32 %v1030, %v1016
        %v1032 = vadd.f32 %v1013, %v1031
        %s1033 = sld [smem:[#allocation2 + $0x1d]]
        %v1034 = vstv %s1033
        %v1035 = vmul.f32 %v1034, %v1016
        %1037 = vrot.lane.b32.xlu0 %v1035, 127
        %v1038 = vpop.permute.xlu0 %1037
        %v1040 = vadd.f32 %v1020, %v1038
        %s1041 = sld [smem:[#allocation2 + $0x4e]]
        %v1042 = vstv %s1041
        %v1043 = vmul.f32 %v1042, %v1016
        %1045 = vrot.lane.b32.xlu0 %v1043, 127
        %v1046 = vpop.permute.xlu0 %1045
        %v1048 = vadd.f32 %v1024, %v1046
        %s1049 = sld [smem:[#allocation2 + $0x7f]]
        %v1050 = vstv %s1049
        %v1051 = vmul.f32 %v1050, %v1016
        %1053 = vrot.lane.b32.xlu0 %v1051, 127
        %v1054 = vpop.permute.xlu0 %1053
        %v1056 = vadd.f32 %v1028, %v1054
        %s1057 = sld [smem:[#allocation2 + $0xb0]]
        %v1058 = vstv %s1057
        %v1059 = vmul.f32 %v1058, %v1016
        %1061 = vrot.lane.b32.xlu0 %v1059, 127
        %v1062 = vpop.permute.xlu0 %1061
        %v1064 = vadd.f32 %v1032, %v1062
        %s1065 = sld [smem:[#allocation2 + $0x1e]]
        %v1066 = vstv %s1065
        %v1067 = vmul.f32 %v1066, %v1016
        %1069 = vrot.lane.b32.xlu0 %v1067, 126
        %v1070 = vpop.permute.xlu0 %1069
        %v1072 = vadd.f32 %v1040, %v1070
        %s1073 = sld [smem:[#allocation2 + $0x4f]]
        %v1074 = vstv %s1073
        %v1075 = vmul.f32 %v1074, %v1016
        %1077 = vrot.lane.b32.xlu0 %v1075, 126
        %v1078 = vpop.permute.xlu0 %1077
        %v1080 = vadd.f32 %v1048, %v1078
        %s1081 = sld [smem:[#allocation2 + $0x80]]
        %v1082 = vstv %s1081
        %v1083 = vmul.f32 %v1082, %v1016
        %1085 = vrot.lane.b32.xlu0 %v1083, 126
        %v1086 = vpop.permute.xlu0 %1085
        %v1088 = vadd.f32 %v1056, %v1086
        %s1089 = sld [smem:[#allocation2 + $0xb1]]
        %v1090 = vstv %s1089
        %v1091 = vmul.f32 %v1090, %v1016
        %1093 = vrot.lane.b32.xlu0 %v1091, 126
        %v1094 = vpop.permute.xlu0 %1093
        %v1096 = vadd.f32 %v1064, %v1094
        %s1097 = sld [smem:[#allocation2 + $0x1f]]
        %v1098 = vstv %s1097
        %v1099 = vmul.f32 %v1098, %v1016
        %1101 = vrot.lane.b32.xlu0 %v1099, 125
        %v1102 = vpop.permute.xlu0 %1101
        %v1104 = vadd.f32 %v1072, %v1102
        %s1105 = sld [smem:[#allocation2 + $0x50]]
        %v1106 = vstv %s1105
        %v1107 = vmul.f32 %v1106, %v1016
        %1109 = vrot.lane.b32.xlu0 %v1107, 125
        %v1110 = vpop.permute.xlu0 %1109
        %v1112 = vadd.f32 %v1080, %v1110
        %s1113 = sld [smem:[#allocation2 + $0x81]]
        %v1114 = vstv %s1113
        %v1115 = vmul.f32 %v1114, %v1016
        %1117 = vrot.lane.b32.xlu0 %v1115, 125
        %v1118 = vpop.permute.xlu0 %1117
        %v1120 = vadd.f32 %v1088, %v1118
        %s1121 = sld [smem:[#allocation2 + $0xb2]]
        %v1122 = vstv %s1121
        %v1123 = vmul.f32 %v1122, %v1016
        %1125 = vrot.lane.b32.xlu0 %v1123, 125
        %v1126 = vpop.permute.xlu0 %1125
        %v1128 = vadd.f32 %v1096, %v1126
        %s1129 = sld [smem:[#allocation2 + $0x20]]
        %v1130 = vstv %s1129
        %v1131 = vmul.f32 %v1130, %v1016
        %1133 = vrot.lane.b32.xlu0 %v1131, 124
        %v1134 = vpop.permute.xlu0 %1133
        %v1136 = vadd.f32 %v1104, %v1134
        %s1137 = sld [smem:[#allocation2 + $0x51]]
        %v1138 = vstv %s1137
        %v1139 = vmul.f32 %v1138, %v1016
        %1141 = vrot.lane.b32.xlu0 %v1139, 124
        %v1142 = vpop.permute.xlu0 %1141
        %v1144 = vadd.f32 %v1112, %v1142
        %s1145 = sld [smem:[#allocation2 + $0x82]]
        %v1146 = vstv %s1145
        %v1147 = vmul.f32 %v1146, %v1016
        %1149 = vrot.lane.b32.xlu0 %v1147, 124
        %v1150 = vpop.permute.xlu0 %1149
        %v1152 = vadd.f32 %v1120, %v1150
        %s1153 = sld [smem:[#allocation2 + $0xb3]]
        %v1154 = vstv %s1153
        %v1155 = vmul.f32 %v1154, %v1016
        %1157 = vrot.lane.b32.xlu0 %v1155, 124
        %v1158 = vpop.permute.xlu0 %1157
        %v1160 = vadd.f32 %v1128, %v1158
        %s1161 = sld [smem:[#allocation2 + $0x21]]
        %v1162 = vstv %s1161
        %v1163 = vmul.f32 %v1162, %v1016
        %1165 = vrot.lane.b32.xlu0 %v1163, 123
        %v1166 = vpop.permute.xlu0 %1165
        %v1168 = vadd.f32 %v1136, %v1166
        %s1169 = sld [smem:[#allocation2 + $0x52]]
        %v1170 = vstv %s1169
        %v1171 = vmul.f32 %v1170, %v1016
        %1173 = vrot.lane.b32.xlu0 %v1171, 123
        %v1174 = vpop.permute.xlu0 %1173
        %v1176 = vadd.f32 %v1144, %v1174
        %s1177 = sld [smem:[#allocation2 + $0x83]]
        %v1178 = vstv %s1177
        %v1179 = vmul.f32 %v1178, %v1016
        %1181 = vrot.lane.b32.xlu0 %v1179, 123
        %v1182 = vpop.permute.xlu0 %1181
        %v1184 = vadd.f32 %v1152, %v1182
        %s1185 = sld [smem:[#allocation2 + $0xb4]]
        %v1186 = vstv %s1185
        %v1187 = vmul.f32 %v1186, %v1016
        %1189 = vrot.lane.b32.xlu0 %v1187, 123
        %v1190 = vpop.permute.xlu0 %1189
        %v1192 = vadd.f32 %v1160, %v1190
        %s1193 = sld [smem:[#allocation2 + $0x22]]
        %v1194 = vstv %s1193
        %v1195 = vmul.f32 %v1194, %v1016
        %1197 = vrot.lane.b32.xlu0 %v1195, 122
        %v1198 = vpop.permute.xlu0 %1197
        %v1200 = vadd.f32 %v1168, %v1198
        %s1201 = sld [smem:[#allocation2 + $0x53]]
        %v1202 = vstv %s1201
        %v1203 = vmul.f32 %v1202, %v1016
        %1205 = vrot.lane.b32.xlu0 %v1203, 122
        %v1206 = vpop.permute.xlu0 %1205
        %v1208 = vadd.f32 %v1176, %v1206
        %s1209 = sld [smem:[#allocation2 + $0x84]]
        %v1210 = vstv %s1209
        %v1211 = vmul.f32 %v1210, %v1016
        %1213 = vrot.lane.b32.xlu0 %v1211, 122
        %v1214 = vpop.permute.xlu0 %1213
        %v1216 = vadd.f32 %v1184, %v1214
        %s1217 = sld [smem:[#allocation2 + $0xb5]]
        %v1218 = vstv %s1217
        %v1219 = vmul.f32 %v1218, %v1016
        %1221 = vrot.lane.b32.xlu0 %v1219, 122
        %v1222 = vpop.permute.xlu0 %1221
        %v1224 = vadd.f32 %v1192, %v1222
        %s1225 = sadd.s32 %s170, 5
        %s1226 = scalar_lea.vmem %s169, %s1225
        %v1227 = vld [vmem:[%s1226] sm:$0xff]
        %s1228 = sld [smem:[#allocation2 + $0x23]]
        %v1229 = vstv %s1228
        %v1230 = vmul.f32 %v1229, %v1227
        %v1231 = vadd.f32 %v1200, %v1230
        %s1232 = sld [smem:[#allocation2 + $0x54]]
        %v1233 = vstv %s1232
        %v1234 = vmul.f32 %v1233, %v1227
        %v1235 = vadd.f32 %v1208, %v1234
        %s1236 = sld [smem:[#allocation2 + $0x85]]
        %v1237 = vstv %s1236
        %v1238 = vmul.f32 %v1237, %v1227
        %v1239 = vadd.f32 %v1216, %v1238
        %s1240 = sld [smem:[#allocation2 + $0xb6]]
        %v1241 = vstv %s1240
        %v1242 = vmul.f32 %v1241, %v1227
        %v1243 = vadd.f32 %v1224, %v1242
        %s1244 = sld [smem:[#allocation2 + $0x24]]
        %v1245 = vstv %s1244
        %v1246 = vmul.f32 %v1245, %v1227
        %1248 = vrot.lane.b32.xlu0 %v1246, 127
        %v1249 = vpop.permute.xlu0 %1248
        %v1251 = vadd.f32 %v1231, %v1249
        %s1252 = sld [smem:[#allocation2 + $0x55]]
        %v1253 = vstv %s1252
        %v1254 = vmul.f32 %v1253, %v1227
        %1256 = vrot.lane.b32.xlu0 %v1254, 127
        %v1257 = vpop.permute.xlu0 %1256
        %v1259 = vadd.f32 %v1235, %v1257
        %s1260 = sld [smem:[#allocation2 + $0x86]]
        %v1261 = vstv %s1260
        %v1262 = vmul.f32 %v1261, %v1227
        %1264 = vrot.lane.b32.xlu0 %v1262, 127
        %v1265 = vpop.permute.xlu0 %1264
        %v1267 = vadd.f32 %v1239, %v1265
        %s1268 = sld [smem:[#allocation2 + $0xb7]]
        %v1269 = vstv %s1268
        %v1270 = vmul.f32 %v1269, %v1227
        %1272 = vrot.lane.b32.xlu0 %v1270, 127
        %v1273 = vpop.permute.xlu0 %1272
        %v1275 = vadd.f32 %v1243, %v1273
        %s1276 = sld [smem:[#allocation2 + $0x25]]
        %v1277 = vstv %s1276
        %v1278 = vmul.f32 %v1277, %v1227
        %1280 = vrot.lane.b32.xlu0 %v1278, 126
        %v1281 = vpop.permute.xlu0 %1280
        %v1283 = vadd.f32 %v1251, %v1281
        %s1284 = sld [smem:[#allocation2 + $0x56]]
        %v1285 = vstv %s1284
        %v1286 = vmul.f32 %v1285, %v1227
        %1288 = vrot.lane.b32.xlu0 %v1286, 126
        %v1289 = vpop.permute.xlu0 %1288
        %v1291 = vadd.f32 %v1259, %v1289
        %s1292 = sld [smem:[#allocation2 + $0x87]]
        %v1293 = vstv %s1292
        %v1294 = vmul.f32 %v1293, %v1227
        %1296 = vrot.lane.b32.xlu0 %v1294, 126
        %v1297 = vpop.permute.xlu0 %1296
        %v1299 = vadd.f32 %v1267, %v1297
        %s1300 = sld [smem:[#allocation2 + $0xb8]]
        %v1301 = vstv %s1300
        %v1302 = vmul.f32 %v1301, %v1227
        %1304 = vrot.lane.b32.xlu0 %v1302, 126
        %v1305 = vpop.permute.xlu0 %1304
        %v1307 = vadd.f32 %v1275, %v1305
        %s1308 = sld [smem:[#allocation2 + $0x26]]
        %v1309 = vstv %s1308
        %v1310 = vmul.f32 %v1309, %v1227
        %1312 = vrot.lane.b32.xlu0 %v1310, 125
        %v1313 = vpop.permute.xlu0 %1312
        %v1315 = vadd.f32 %v1283, %v1313
        %s1316 = sld [smem:[#allocation2 + $0x57]]
        %v1317 = vstv %s1316
        %v1318 = vmul.f32 %v1317, %v1227
        %1320 = vrot.lane.b32.xlu0 %v1318, 125
        %v1321 = vpop.permute.xlu0 %1320
        %v1323 = vadd.f32 %v1291, %v1321
        %s1324 = sld [smem:[#allocation2 + $0x88]]
        %v1325 = vstv %s1324
        %v1326 = vmul.f32 %v1325, %v1227
        %1328 = vrot.lane.b32.xlu0 %v1326, 125
        %v1329 = vpop.permute.xlu0 %1328
        %v1331 = vadd.f32 %v1299, %v1329
        %s1332 = sld [smem:[#allocation2 + $0xb9]]
        %v1333 = vstv %s1332
        %v1334 = vmul.f32 %v1333, %v1227
        %1336 = vrot.lane.b32.xlu0 %v1334, 125
        %v1337 = vpop.permute.xlu0 %1336
        %v1339 = vadd.f32 %v1307, %v1337
        %s1340 = sld [smem:[#allocation2 + $0x27]]
        %v1341 = vstv %s1340
        %v1342 = vmul.f32 %v1341, %v1227
        %1344 = vrot.lane.b32.xlu0 %v1342, 124
        %v1345 = vpop.permute.xlu0 %1344
        %v1347 = vadd.f32 %v1315, %v1345
        %s1348 = sld [smem:[#allocation2 + $0x58]]
        %v1349 = vstv %s1348
        %v1350 = vmul.f32 %v1349, %v1227
        %1352 = vrot.lane.b32.xlu0 %v1350, 124
        %v1353 = vpop.permute.xlu0 %1352
        %v1355 = vadd.f32 %v1323, %v1353
        %s1356 = sld [smem:[#allocation2 + $0x89]]
        %v1357 = vstv %s1356
        %v1358 = vmul.f32 %v1357, %v1227
        %1360 = vrot.lane.b32.xlu0 %v1358, 124
        %v1361 = vpop.permute.xlu0 %1360
        %v1363 = vadd.f32 %v1331, %v1361
        %s1364 = sld [smem:[#allocation2 + $0xba]]
        %v1365 = vstv %s1364
        %v1366 = vmul.f32 %v1365, %v1227
        %1368 = vrot.lane.b32.xlu0 %v1366, 124
        %v1369 = vpop.permute.xlu0 %1368
        %v1371 = vadd.f32 %v1339, %v1369
        %s1372 = sld [smem:[#allocation2 + $0x28]]
        %v1373 = vstv %s1372
        %v1374 = vmul.f32 %v1373, %v1227
        %1376 = vrot.lane.b32.xlu0 %v1374, 123
        %v1377 = vpop.permute.xlu0 %1376
        %v1379 = vadd.f32 %v1347, %v1377
        %s1380 = sld [smem:[#allocation2 + $0x59]]
        %v1381 = vstv %s1380
        %v1382 = vmul.f32 %v1381, %v1227
        %1384 = vrot.lane.b32.xlu0 %v1382, 123
        %v1385 = vpop.permute.xlu0 %1384
        %v1387 = vadd.f32 %v1355, %v1385
        %s1388 = sld [smem:[#allocation2 + $0x8a]]
        %v1389 = vstv %s1388
        %v1390 = vmul.f32 %v1389, %v1227
        %1392 = vrot.lane.b32.xlu0 %v1390, 123
        %v1393 = vpop.permute.xlu0 %1392
        %v1395 = vadd.f32 %v1363, %v1393
        %s1396 = sld [smem:[#allocation2 + $0xbb]]
        %v1397 = vstv %s1396
        %v1398 = vmul.f32 %v1397, %v1227
        %1400 = vrot.lane.b32.xlu0 %v1398, 123
        %v1401 = vpop.permute.xlu0 %1400
        %v1403 = vadd.f32 %v1371, %v1401
        %s1404 = sld [smem:[#allocation2 + $0x29]]
        %v1405 = vstv %s1404
        %v1406 = vmul.f32 %v1405, %v1227
        %1408 = vrot.lane.b32.xlu0 %v1406, 122
        %v1409 = vpop.permute.xlu0 %1408
        %v1411 = vadd.f32 %v1379, %v1409
        %s1412 = sld [smem:[#allocation2 + $0x5a]]
        %v1413 = vstv %s1412
        %v1414 = vmul.f32 %v1413, %v1227
        %1416 = vrot.lane.b32.xlu0 %v1414, 122
        %v1417 = vpop.permute.xlu0 %1416
        %v1419 = vadd.f32 %v1387, %v1417
        %s1420 = sld [smem:[#allocation2 + $0x8b]]
        %v1421 = vstv %s1420
        %v1422 = vmul.f32 %v1421, %v1227
        %1424 = vrot.lane.b32.xlu0 %v1422, 122
        %v1425 = vpop.permute.xlu0 %1424
        %v1427 = vadd.f32 %v1395, %v1425
        %s1428 = sld [smem:[#allocation2 + $0xbc]]
        %v1429 = vstv %s1428
        %v1430 = vmul.f32 %v1429, %v1227
        %1432 = vrot.lane.b32.xlu0 %v1430, 122
        %v1433 = vpop.permute.xlu0 %1432
        %v1435 = vadd.f32 %v1403, %v1433
        %s1436 = sadd.s32 %s170, 6
        %s1437 = scalar_lea.vmem %s169, %s1436
        %v1438 = vld [vmem:[%s1437] sm:$0xff]
        %s1439 = sld [smem:[#allocation2 + $0x2a]]
        %v1440 = vstv %s1439
        %v1441 = vmul.f32 %v1440, %v1438
        %v1442 = vadd.f32 %v1411, %v1441
        %s1443 = sld [smem:[#allocation2 + $0x5b]]
        %v1444 = vstv %s1443
        %v1445 = vmul.f32 %v1444, %v1438
        %v1446 = vadd.f32 %v1419, %v1445
        %s1447 = sld [smem:[#allocation2 + $0x8c]]
        %v1448 = vstv %s1447
        %v1449 = vmul.f32 %v1448, %v1438
        %v1450 = vadd.f32 %v1427, %v1449
        %s1451 = sld [smem:[#allocation2 + $0xbd]]
        %v1452 = vstv %s1451
        %v1453 = vmul.f32 %v1452, %v1438
        %v1454 = vadd.f32 %v1435, %v1453
        %s1455 = sld [smem:[#allocation2 + $0x2b]]
        %v1456 = vstv %s1455
        %v1457 = vmul.f32 %v1456, %v1438
        %1459 = vrot.lane.b32.xlu0 %v1457, 127
        %v1460 = vpop.permute.xlu0 %1459
        %v1462 = vadd.f32 %v1442, %v1460
        %s1463 = sld [smem:[#allocation2 + $0x5c]]
        %v1464 = vstv %s1463
        %v1465 = vmul.f32 %v1464, %v1438
        %1467 = vrot.lane.b32.xlu0 %v1465, 127
        %v1468 = vpop.permute.xlu0 %1467
        %v1470 = vadd.f32 %v1446, %v1468
        %s1471 = sld [smem:[#allocation2 + $0x8d]]
        %v1472 = vstv %s1471
        %v1473 = vmul.f32 %v1472, %v1438
        %1475 = vrot.lane.b32.xlu0 %v1473, 127
        %v1476 = vpop.permute.xlu0 %1475
        %v1478 = vadd.f32 %v1450, %v1476
        %s1479 = sld [smem:[#allocation2 + $0xbe]]
        %v1480 = vstv %s1479
        %v1481 = vmul.f32 %v1480, %v1438
        %1483 = vrot.lane.b32.xlu0 %v1481, 127
        %v1484 = vpop.permute.xlu0 %1483
        %v1486 = vadd.f32 %v1454, %v1484
        %s1487 = sld [smem:[#allocation2 + $0x2c]]
        %v1488 = vstv %s1487
        %v1489 = vmul.f32 %v1488, %v1438
        %1491 = vrot.lane.b32.xlu0 %v1489, 126
        %v1492 = vpop.permute.xlu0 %1491
        %v1494 = vadd.f32 %v1462, %v1492
        %s1495 = sld [smem:[#allocation2 + $0x5d]]
        %v1496 = vstv %s1495
        %v1497 = vmul.f32 %v1496, %v1438
        %1499 = vrot.lane.b32.xlu0 %v1497, 126
        %v1500 = vpop.permute.xlu0 %1499
        %v1502 = vadd.f32 %v1470, %v1500
        %s1503 = sld [smem:[#allocation2 + $0x8e]]
        %v1504 = vstv %s1503
        %v1505 = vmul.f32 %v1504, %v1438
        %1507 = vrot.lane.b32.xlu0 %v1505, 126
        %v1508 = vpop.permute.xlu0 %1507
        %v1510 = vadd.f32 %v1478, %v1508
        %s1511 = sld [smem:[#allocation2 + $0xbf]]
        %v1512 = vstv %s1511
        %v1513 = vmul.f32 %v1512, %v1438
        %1515 = vrot.lane.b32.xlu0 %v1513, 126
        %v1516 = vpop.permute.xlu0 %1515
        %v1518 = vadd.f32 %v1486, %v1516
        %s1519 = sld [smem:[#allocation2 + $0x2d]]
        %v1520 = vstv %s1519
        %v1521 = vmul.f32 %v1520, %v1438
        %1523 = vrot.lane.b32.xlu0 %v1521, 125
        %v1524 = vpop.permute.xlu0 %1523
        %v1526 = vadd.f32 %v1494, %v1524
        %s1527 = sld [smem:[#allocation2 + $0x5e]]
        %v1528 = vstv %s1527
        %v1529 = vmul.f32 %v1528, %v1438
        %1531 = vrot.lane.b32.xlu0 %v1529, 125
        %v1532 = vpop.permute.xlu0 %1531
        %v1534 = vadd.f32 %v1502, %v1532
        %s1535 = sld [smem:[#allocation2 + $0x8f]]
        %v1536 = vstv %s1535
        %v1537 = vmul.f32 %v1536, %v1438
        %1539 = vrot.lane.b32.xlu0 %v1537, 125
        %v1540 = vpop.permute.xlu0 %1539
        %v1542 = vadd.f32 %v1510, %v1540
        %s1543 = sld [smem:[#allocation2 + $0xc0]]
        %v1544 = vstv %s1543
        %v1545 = vmul.f32 %v1544, %v1438
        %1547 = vrot.lane.b32.xlu0 %v1545, 125
        %v1548 = vpop.permute.xlu0 %1547
        %v1550 = vadd.f32 %v1518, %v1548
        %s1551 = sld [smem:[#allocation2 + $0x2e]]
        %v1552 = vstv %s1551
        %v1553 = vmul.f32 %v1552, %v1438
        %1555 = vrot.lane.b32.xlu0 %v1553, 124
        %v1556 = vpop.permute.xlu0 %1555
        %v1558 = vadd.f32 %v1526, %v1556
        %s1559 = sld [smem:[#allocation2 + $0x5f]]
        %v1560 = vstv %s1559
        %v1561 = vmul.f32 %v1560, %v1438
        %1563 = vrot.lane.b32.xlu0 %v1561, 124
        %v1564 = vpop.permute.xlu0 %1563
        %v1566 = vadd.f32 %v1534, %v1564
        %s1567 = sld [smem:[#allocation2 + $0x90]]
        %v1568 = vstv %s1567
        %v1569 = vmul.f32 %v1568, %v1438
        %1571 = vrot.lane.b32.xlu0 %v1569, 124
        %v1572 = vpop.permute.xlu0 %1571
        %v1574 = vadd.f32 %v1542, %v1572
        %s1575 = sld [smem:[#allocation2 + $0xc1]]
        %v1576 = vstv %s1575
        %v1577 = vmul.f32 %v1576, %v1438
        %1579 = vrot.lane.b32.xlu0 %v1577, 124
        %v1580 = vpop.permute.xlu0 %1579
        %v1582 = vadd.f32 %v1550, %v1580
        %s1583 = sld [smem:[#allocation2 + $0x2f]]
        %v1584 = vstv %s1583
        %v1585 = vmul.f32 %v1584, %v1438
        %1587 = vrot.lane.b32.xlu0 %v1585, 123
        %v1588 = vpop.permute.xlu0 %1587
        %v1590 = vadd.f32 %v1558, %v1588
        %s1591 = sld [smem:[#allocation2 + $0x60]]
        %v1592 = vstv %s1591
        %v1593 = vmul.f32 %v1592, %v1438
        %1595 = vrot.lane.b32.xlu0 %v1593, 123
        %v1596 = vpop.permute.xlu0 %1595
        %v1598 = vadd.f32 %v1566, %v1596
        %s1599 = sld [smem:[#allocation2 + $0x91]]
        %v1600 = vstv %s1599
        %v1601 = vmul.f32 %v1600, %v1438
        %1603 = vrot.lane.b32.xlu0 %v1601, 123
        %v1604 = vpop.permute.xlu0 %1603
        %v1606 = vadd.f32 %v1574, %v1604
        %s1607 = sld [smem:[#allocation2 + $0xc2]]
        %v1608 = vstv %s1607
        %v1609 = vmul.f32 %v1608, %v1438
        %1611 = vrot.lane.b32.xlu0 %v1609, 123
        %v1612 = vpop.permute.xlu0 %1611
        %v1614 = vadd.f32 %v1582, %v1612
        %s1615 = sld [smem:[#allocation2 + $0x30]]
        %v1616 = vstv %s1615
        %v1617 = vmul.f32 %v1616, %v1438
        %1619 = vrot.lane.b32.xlu0 %v1617, 122
        %v1620 = vpop.permute.xlu0 %1619
        %v1622 = vadd.f32 %v1590, %v1620
        %s1623 = sld [smem:[#allocation2 + $0x61]]
        %v1624 = vstv %s1623
        %v1625 = vmul.f32 %v1624, %v1438
        %1627 = vrot.lane.b32.xlu0 %v1625, 122
        %v1628 = vpop.permute.xlu0 %1627
        %v1630 = vadd.f32 %v1598, %v1628
        %s1631 = sld [smem:[#allocation2 + $0x92]]
        %v1632 = vstv %s1631
        %v1633 = vmul.f32 %v1632, %v1438
        %1635 = vrot.lane.b32.xlu0 %v1633, 122
        %v1636 = vpop.permute.xlu0 %1635
        %v1638 = vadd.f32 %v1606, %v1636
        %s1639 = sld [smem:[#allocation2 + $0xc3]]
        %v1640 = vstv %s1639
        %v1641 = vmul.f32 %v1640, %v1438
        %1643 = vrot.lane.b32.xlu0 %v1641, 122
        %v1644 = vpop.permute.xlu0 %1643
        %v1646 = vadd.f32 %v1614, %v1644
        %vm1647 = vcmask 130048
        %1648 = vst.msk [vmem:[%s164] sm:$0xff] %vm1647, %v1622
        %s1649 = scalar_lea.vmem %s164, 8 [#allocation5]
        %1650 = vst.msk [vmem:[%s1649] sm:$0xff] %vm1647, %v1630
        %s1651 = scalar_lea.vmem %s164, 16 [#allocation5]
        %1652 = vst.msk [vmem:[%s1651] sm:$0xff] %vm1647, %v1638
        %s1653 = scalar_lea.vmem %s164, 24 [#allocation5]
        %1654 = vst.msk [vmem:[%s1653] sm:$0xff] %vm1647, %v1646
        %s1655 = sand.u32 %s86, 1
        %s1656 = scalar_lea.sflag [#allocation3], %s1655
        %s1657 = sand.u32 %s86, 1
        %s1658 = smul.addr %s1657, 32
        %s1659 = scalar_lea.vmem [#allocation5], %s1658
        // Predicated region
        $region33: #{tpu_custom_call.1} parent=27 // pred_check
          %p1660 = pneg %p96
        $region34: #{tpu_custom_call.1} parent=27 // pred_check_branch
          %1662 = sbr.rel (%p1660) target = $region36
        $region35: #{tpu_custom_call.1} parent=27 // pred_region
          %s1664 = ssub.s32 512, 512
          %1665 = vsyncadd %s1656, %s1664
          %s1666 = smul.addr %s21, 8
          %s1667 = sadd.s32 %s22, %s1666
          %s1668 = smul.addr %s1667, 128
          %s1669 = scalar_lea.hbm %s2, %s1668
          %s1670 = sshll.u32 %s1659, 4
          %s1671 = int_to_ptr.vmem [resolvable:$true] %s1670
          %1676 = dma.vmem_to_hbm [thread:$0]  %s1671, 512, %s1669, %s1656, 128, 256, 8
        $region36: #{tpu_custom_call.1} parent=27 // pred_fallthru
          _
      $region28: #{tpu_custom_call.1} parent=5 // pred_fallthru
        _
      %p1677 = scmp.le.s32.totalorder 2, %s12
      // Predicated region
      $region37: #{tpu_custom_call.1} parent=5 // pred_check
        %p1678 = pneg %p1677
      $region38: #{tpu_custom_call.1} parent=5 // pred_check_branch
        %1680 = sbr.rel (%p1678) target = $region40
      $region39: #{tpu_custom_call.1} parent=5 // pred_region
        %s1681 = ssub.s32 %s12, 2
        // Predicated region
        $region41: #{tpu_custom_call.1} parent=39 // pred_check
          %p1682 = pneg %p102
        $region42: #{tpu_custom_call.1} parent=39 // pred_check_branch
          %1684 = sbr.rel (%p1682) target = $region44
        $region43: #{tpu_custom_call.1} parent=39 // pred_region
          %s1685 = sand.u32 %s87, 1
          %s1686 = scalar_lea.sflag [#allocation3], %s1685
          %s1687 = sand.u32 %s87, 1
          %s1688 = smul.addr %s1687, 32
          %s1689 = scalar_lea.vmem [#allocation5], %s1688
          %1690 = dma.done %s1686, 512
        $region44: #{tpu_custom_call.1} parent=39 // pred_fallthru
          _
      $region40: #{tpu_custom_call.1} parent=5 // pred_fallthru
        _
    $region6: #{tpu_custom_call.1} parent=1 // loop_footer
      %s16 = sadd.s32 1, %s12
    $region7: #{tpu_custom_call.1} parent=1 // loop_footer_branch
      %11 = sbr.rel target = $region3
    $region8: #{tpu_custom_call.1} parent=1 // loop_exit
      _
    %1691 = vsyncpa [#allocation3], 1
    %s1692 = scalar_lea.sflag [#allocation3], 1
    %1693 = vsyncpa %s1692, 1
    %1694 = vsyncpa [#allocation4], 1
    %s1695 = scalar_lea.sflag [#allocation4], 1
    %1696 = vsyncpa %s1695, 1

</llo_original>
